<compile_context>
chip_gen: v5e
topology: v5e:2x2
jax: 0.10.0
libtpu: 0.0.40
codegen_flags: <defaults>
</compile_context>

<pallas_src>
import jax
import jax.numpy as jnp
from jax.experimental import pallas as pl
from jax.experimental.pallas import tpu as pltpu

SIZES = (1, 2, 3, 6)
S_SUM = sum(s * s for s in SIZES)          # 1 + 4 + 9 + 36 = 50
S_PAD = 64                                 # padded pooled-cell count (clean tiling)


# ----------------------------------------------------------------------------
# Small dense helpers (adaptive avg-pool / bilinear upsample as matrices)
# ----------------------------------------------------------------------------
def _adaptive_pool_matrix(in_size: int, out_size: int) -> jnp.ndarray:
    """(out_size, in_size) averaging matrix matching nn.AdaptiveAvgPool2d."""
    rows = []
    for i in range(out_size):
        start = (i * in_size) // out_size
        end = -((-(i + 1) * in_size) // out_size)  # ceil((i+1)*in/out)
        row = [0.0] * in_size
        for j in range(start, end):
            row[j] = 1.0 / (end - start)
        rows.append(row)
    return jnp.asarray(rows, dtype=jnp.float32)


def _bilinear_matrix(out_size: int, in_size: int) -> jnp.ndarray:
    """(out_size, in_size) bilinear weights, PyTorch align_corners=False."""
    dst = jnp.arange(out_size, dtype=jnp.float32)
    scale = in_size / out_size
    src = jnp.maximum((dst + 0.5) * scale - 0.5, 0.0)
    i0 = jnp.minimum(jnp.floor(src).astype(jnp.int32), in_size - 1)
    i1 = jnp.minimum(i0 + 1, in_size - 1)
    lam = src - i0.astype(jnp.float32)
    w0 = jax.nn.one_hot(i0, in_size, dtype=jnp.float32) * (1.0 - lam)[:, None]
    w1 = jax.nn.one_hot(i1, in_size, dtype=jnp.float32) * lam[:, None]
    return w0 + w1


def _pick_tile_p(hw, n_imgs, C, Cout, budget_bytes=24 << 20, cap=2048):
    """Largest power-of-two multiple of 128 pixels/tile fitting the VMEM budget."""
    bytes_per_px = (2 * (C + S_PAD + Cout)      # streamed tiles, double-buffered
                    + 8 * C                     # mm = (8C, tile_p) f32 temporary
                    + 6 * C + Cout) * 4         # fW / gates / num / den / overall / out
    limit = min(cap, max(128, -(-hw // 128) * 128))   # never exceed padded HW
    t = 128
    while t * 2 <= limit and (t * 2) * bytes_per_px <= budget_bytes:
        t *= 2
    # keep >= 2 grid points so a v7x megacore doesn't idle its second TensorCore
    while t > 128 and n_imgs * (-(-hw // t)) < 2:
        t //= 2
    return t


# ----------------------------------------------------------------------------
# Pallas kernel: pyramid reconstruction + sigmoid gating + fusion + bottleneck
#   channels-major: every streamed / intermediate slab is (channels, pixels)
# ----------------------------------------------------------------------------
def ctx_kernel(feats_ref, u_ref, pyr_ref, wnw_ref, wnb_ref,
               bwo_ref, bwf_ref, bb_ref, out_ref):
    C = wnw_ref.shape[0]

    f = feats_ref[0]                                   # (C, T)      channels x pixels
    u = u_ref[...]                                     # (S_pad, T)  bilinear weights^T
    pyr = pyr_ref[0]                                   # (8C, S_pad) [m rows | mW rows]

    # One matmul reconstructs all four upsampled branches m_i AND weight_net(m_i)
    # (the 1x1 weight_net conv commutes with the per-pixel bilinear upsample).
    mm = jnp.dot(pyr, u, preferred_element_type=jnp.float32)            # (8C, T)
    # weight_net applied to feats once (linearity of the 1x1 conv + bias).
    fW = jnp.dot(wnw_ref[...], f, preferred_element_type=jnp.float32) + wnb_ref[...]

    num = jnp.zeros_like(fW)
    den = jnp.zeros_like(fW)
    for i in range(4):                                 # static unroll; slabs fully dense
        m_i = mm[i * C:(i + 1) * C, :]                 # upsampled branch i
        mW_i = mm[4 * C + i * C:4 * C + (i + 1) * C, :]  # weight_net(branch i), no bias
        w_i = jax.nn.sigmoid(fW - mW_i)                # sigmoid(weight_net(f - m_i))
        num = num + m_i * w_i
        den = den + w_i

    # den = sum of 4 sigmoids in (0, 4]: EUP vrcp + one Newton step ~ f32 accuracy.
    r = pl.reciprocal(den, approx=True)
    r = r * (2.0 - den * r)
    overall = num * r

    # bottleneck 1x1 conv on cat([overall, feats]) — without materializing the concat.
    out = (jnp.dot(bwo_ref[...], overall, preferred_element_type=jnp.float32)
           + jnp.dot(bwf_ref[...], f, preferred_element_type=jnp.float32)
           + bb_ref[...])
    out_ref[0] = jnp.maximum(out, 0.0).astype(out_ref.dtype)


# ----------------------------------------------------------------------------
# Wrapper
# ----------------------------------------------------------------------------
def contextual_module(feats, params, *, bf16_streams=False,
                      vmem_budget_bytes=24 << 20):
    N, C, H, W = feats.shape
    Cout = params["bottleneck_w"].shape[0]
    HW = H * W
    tile_p = _pick_tile_p(HW, N, C, Cout, budget_bytes=vmem_budget_bytes)
    HW_pad = -(-HW // tile_p) * tile_p
    tiles_per_img = HW_pad // tile_p

    wnw = params["weight_net_w"]                       # (C, C) out x in

    # ---- per-batch pooled + 1x1-conved pyramid constant, channels-major ----
    #   rows [0, 4C)  : m_i     (branch i at row block i*C)
    #   rows [4C, 8C) : weight_net(m_i) without bias (bias folded into fW)
    pyrT = jnp.zeros((N, 8 * C, S_PAD), jnp.float32)
    uT_blocks = []
    off = 0
    for i, (size, wc) in enumerate(zip(SIZES, params["scale_ws"])):
        Py = _adaptive_pool_matrix(H, size)            # (size, H)
        Px = _adaptive_pool_matrix(W, size)            # (size, W)
        pooled = jnp.einsum("ih,nchw,jw->ncij", Py, feats, Px)     # (N, C, s, s)
        conved = jnp.einsum("oc,ncij->noij", wc, pooled)           # 1x1 conv, no bias
        blkT = conved.reshape(N, C, size * size)                   # (N, C, s^2)
        pyrT = pyrT.at[:, i * C:(i + 1) * C, off:off + size * size].set(blkT)
        pyrT = pyrT.at[:, 4 * C + i * C:4 * C + (i + 1) * C,
                       off:off + size * size].set(
            jnp.einsum("oc,ncs->nos", wnw, blkT))      # pre-apply weight_net
        Uy = _bilinear_matrix(H, size)                 # (H, size)
        Ux = _bilinear_matrix(W, size)                 # (W, size)
        uT_blocks.append(
            jnp.einsum("hj,wk->jkhw", Uy, Ux).reshape(size * size, HW))
        off += size * size
    uT = jnp.concatenate(uT_blocks, axis=0)            # (50, HW)
    uT = jnp.pad(uT, ((0, S_PAD - S_SUM), (0, HW_pad - HW)))

    # feats stay NCHW; just flatten the pixel dims and pad pixels to the tile grid.
    feats_ncp = jnp.pad(feats.reshape(N, C, HW), ((0, 0), (0, 0), (0, HW_pad - HW)))

    wnb = params["weight_net_b"].reshape(C, 1).astype(jnp.float32)
    bwo = params["bottleneck_w"][:, :C]                # (Cout, C) applied to overall
    bwf = params["bottleneck_w"][:, C:]                # (Cout, C) applied to feats
    bb = params["bottleneck_b"].reshape(Cout, 1).astype(jnp.float32)

    stream_dt = jnp.bfloat16 if bf16_streams else jnp.float32
    feats_s = feats_ncp.astype(stream_dt)
    uT_s = uT.astype(stream_dt)
    pyrT_s = pyrT.astype(stream_dt)
    wnw_s = wnw.astype(stream_dt)
    bwo_s = bwo.astype(stream_dt)
    bwf_s = bwf.astype(stream_dt)

    out_p = pl.pallas_call(
        ctx_kernel,
        out_shape=jax.ShapeDtypeStruct((N, Cout, HW_pad), feats.dtype),
        grid_spec=pltpu.PrefetchScalarGridSpec(
            num_scalar_prefetch=0,
            grid=(tiles_per_img, N),                   # u^T changes on the OUTER axis only
            in_specs=[
                pl.BlockSpec((1, C, tile_p), lambda t, n: (n, 0, t)),      # feats
                pl.BlockSpec((S_PAD, tile_p), lambda t, n: (0, t)),        # upsample wts^T
                pl.BlockSpec((1, 8 * C, S_PAD), lambda t, n: (n, 0, 0)),   # pyramid const
                pl.BlockSpec((C, C), lambda t, n: (0, 0)),                 # weight_net W
                pl.BlockSpec((C, 1), lambda t, n: (0, 0)),                 # weight_net b
                pl.BlockSpec((Cout, C), lambda t, n: (0, 0)),              # bottleneck W | overall
                pl.BlockSpec((Cout, C), lambda t, n: (0, 0)),              # bottleneck W | feats
                pl.BlockSpec((Cout, 1), lambda t, n: (0, 0)),              # bottleneck b
            ],
            out_specs=pl.BlockSpec((1, Cout, tile_p), lambda t, n: (n, 0, t)),
        ),
        compiler_params=pltpu.CompilerParams(
            dimension_semantics=("parallel", "parallel"),
            vmem_limit_bytes=40 * 1024 * 1024),
    )(feats_s, uT_s, pyrT_s, wnw_s, wnb, bwo_s, bwf_s, bb)

    # already NCHW: just drop the pixel padding and unflatten.
    return out_p[:, :, :HW].reshape(N, Cout, H, W)


# ----------------------------------------------------------------------------
# Pure-JAX reference of the full forward (numerical cross-check)
# ----------------------------------------------------------------------------
def reference(feats, params):
    N, C, H, W = feats.shape
    ups = []
    for size, wc in zip(SIZES, params["scale_ws"]):
        Py = _adaptive_pool_matrix(H, size)
        Px = _adaptive_pool_matrix(W, size)
        pooled = jnp.einsum("ih,nchw,jw->ncij", Py, feats, Px)
        conved = jnp.einsum("oc,ncij->noij", wc, pooled)
        Uy = _bilinear_matrix(H, size)
        Ux = _bilinear_matrix(W, size)
        ups.append(jnp.einsum("hi,ncij,wj->nchw", Uy, conved, Ux))
    wnw, wnb = params["weight_net_w"], params["weight_net_b"]

    def wnet(x):
        return jnp.einsum("oc,nchw->nohw", wnw, x) + wnb[None, :, None, None]

    weights = [jax.nn.sigmoid(wnet(feats - m)) for m in ups]
    num = sum(m * w for m, w in zip(ups, weights))
    den = sum(weights)
    overall = num / den
    cat = jnp.concatenate([overall, feats], axis=1)
    out = (jnp.einsum("oc,nchw->nohw", params["bottleneck_w"], cat)
           + params["bottleneck_b"][None, :, None, None])
    return jnp.maximum(out, 0.0)


# ----------------------------------------------------------------------------
def init_params(key, features, out_features):
    ks = jax.random.split(key, 8)
    return dict(
        scale_ws=[0.2 * jax.random.normal(ks[i], (features, features), jnp.float32)
                  for i in range(4)],
        weight_net_w=0.2 * jax.random.normal(ks[4], (features, features), jnp.float32),
        weight_net_b=0.1 * jax.random.normal(ks[5], (features,), jnp.float32),
        bottleneck_w=0.2 * jax.random.normal(ks[6], (out_features, 2 * features),
                                             jnp.float32),
        bottleneck_b=0.1 * jax.random.normal(ks[7], (out_features,), jnp.float32),
    )


if __name__ == "__main__":
    N, C, H, W = 2, 32, 16, 16          # features=32
    Cout = 64                           # out_features (512 in the default ctor)
    key = jax.random.PRNGKey(0)
    k_x, k_p = jax.random.split(key)
    feats = jax.random.normal(k_x, (N, C, H, W), jnp.float32)
    params = init_params(k_p, C, Cout)

    out = contextual_module(feats, params)
    out = jax.block_until_ready(out)

    ref = jax.block_until_ready(reference(feats, params))
    assert out.shape == (N, Cout, H, W)
    assert jnp.allclose(out, ref, atol=1e-3, rtol=1e-3), (
        f"max abs err {jnp.max(jnp.abs(out - ref))}")
    print("KERNEL_OK")
</pallas_src>

<mosaic_0001>
module attributes {stable_mosaic.version = 11 : i64} {
  func.func @ctx_kernel(%arg0: i32, %arg1: i32, %arg2: memref<1x32x256xf32, #tpu.memory_space<vmem>>, %arg3: memref<64x256xf32, #tpu.memory_space<vmem>>, %arg4: memref<1x256x64xf32, #tpu.memory_space<vmem>>, %arg5: memref<32x32xf32, #tpu.memory_space<vmem>>, %arg6: memref<32x1xf32, #tpu.memory_space<vmem>>, %arg7: memref<64x32xf32, #tpu.memory_space<vmem>>, %arg8: memref<64x32xf32, #tpu.memory_space<vmem>>, %arg9: memref<64x1xf32, #tpu.memory_space<vmem>>, %arg10: memref<1x64x256xf32, #tpu.memory_space<vmem>>) attributes {dimension_semantics = [#tpu.dimension_semantics<parallel>, #tpu.dimension_semantics<parallel>], iteration_bounds = array<i64: 1, 2>, scalar_prefetch = 0 : i64, scratch_operands = 0 : i64, tpu.core_type = #tpu.core_type<tc>, window_params = [{transform_indices = @transform_0, window_bounds = array<i64: 1, 32, 256>}, {transform_indices = @transform_1, window_bounds = array<i64: 64, 256>}, {transform_indices = @transform_2, window_bounds = array<i64: 1, 256, 64>}, {pipeline_mode = #tpu.pipeline_mode<synchronous>, transform_indices = @transform_3, window_bounds = array<i64: 32, 32>}, {pipeline_mode = #tpu.pipeline_mode<synchronous>, transform_indices = @transform_4, window_bounds = array<i64: 32, 1>}, {pipeline_mode = #tpu.pipeline_mode<synchronous>, transform_indices = @transform_5, window_bounds = array<i64: 64, 32>}, {pipeline_mode = #tpu.pipeline_mode<synchronous>, transform_indices = @transform_6, window_bounds = array<i64: 64, 32>}, {pipeline_mode = #tpu.pipeline_mode<synchronous>, transform_indices = @transform_7, window_bounds = array<i64: 64, 1>}, {transform_indices = @transform_8, window_bounds = array<i64: 1, 64, 256>}]} {
    %c0 = arith.constant 0 : index
    %c0_0 = arith.constant 0 : index
    %c0_1 = arith.constant 0 : index
    %0 = vector.load %arg2[%c0, %c0_0, %c0_1] : memref<1x32x256xf32, #tpu.memory_space<vmem>>, vector<1x32x256xf32>
    %1 = vector.shape_cast %0 : vector<1x32x256xf32> to vector<32x256xf32>
    %c0_2 = arith.constant 0 : index
    %c0_3 = arith.constant 0 : index
    %2 = vector.load %arg3[%c0_2, %c0_3] : memref<64x256xf32, #tpu.memory_space<vmem>>, vector<64x256xf32>
    %c0_4 = arith.constant 0 : index
    %c0_5 = arith.constant 0 : index
    %c0_6 = arith.constant 0 : index
    %3 = vector.load %arg4[%c0_4, %c0_5, %c0_6] : memref<1x256x64xf32, #tpu.memory_space<vmem>>, vector<1x256x64xf32>
    %4 = vector.shape_cast %3 : vector<1x256x64xf32> to vector<256x64xf32>
    %cst = arith.constant dense<0.000000e+00> : vector<256x256xf32>
    %5 = tpu.matmul %4, %2, %cst {dimension_numbers = #tpu.dot_dimension_numbers<[1], [0], [0], [1], [0, 0, 1, 1], [], []>} : vector<256x64xf32>, vector<64x256xf32>, vector<256x256xf32> -> vector<256x256xf32>
    %c0_7 = arith.constant 0 : index
    %c0_8 = arith.constant 0 : index
    %6 = vector.load %arg5[%c0_7, %c0_8] : memref<32x32xf32, #tpu.memory_space<vmem>>, vector<32x32xf32>
    %cst_9 = arith.constant dense<0.000000e+00> : vector<32x256xf32>
    %7 = tpu.matmul %6, %1, %cst_9 {dimension_numbers = #tpu.dot_dimension_numbers<[1], [0], [0], [1], [0, 0, 1, 1], [], []>} : vector<32x32xf32>, vector<32x256xf32>, vector<32x256xf32> -> vector<32x256xf32>
    %c0_10 = arith.constant 0 : index
    %c0_11 = arith.constant 0 : index
    %8 = vector.load %arg6[%c0_10, %c0_11] : memref<32x1xf32, #tpu.memory_space<vmem>>, vector<32x1xf32>
    %9 = vector.broadcast %8 : vector<32x1xf32> to vector<32x256xf32>
    %10 = arith.addf %7, %9 : vector<32x256xf32>
    %cst_12 = arith.constant 0.000000e+00 : f32
    %11 = vector.broadcast %cst_12 : f32 to vector<32x256xf32>
    %cst_13 = arith.constant 0.000000e+00 : f32
    %12 = vector.broadcast %cst_13 : f32 to vector<32x256xf32>
    %13 = vector.extract_strided_slice %5 {offsets = [0, 0], sizes = [32, 256], strides = [1, 1]} : vector<256x256xf32> to vector<32x256xf32>
    %14 = vector.extract_strided_slice %5 {offsets = [128, 0], sizes = [32, 256], strides = [1, 1]} : vector<256x256xf32> to vector<32x256xf32>
    %15 = arith.subf %10, %14 : vector<32x256xf32>
    %16 = arith.negf %15 : vector<32x256xf32>
    %17 = math.exp %16 : vector<32x256xf32>
    %cst_14 = arith.constant 1.000000e+00 : f32
    %18 = vector.broadcast %cst_14 : f32 to vector<32x256xf32>
    %19 = arith.addf %18, %17 : vector<32x256xf32>
    %20 = arith.divf %18, %19 : vector<32x256xf32>
    %21 = arith.mulf %13, %20 : vector<32x256xf32>
    %22 = arith.addf %11, %21 : vector<32x256xf32>
    %23 = arith.addf %12, %20 : vector<32x256xf32>
    %24 = vector.extract_strided_slice %5 {offsets = [32, 0], sizes = [32, 256], strides = [1, 1]} : vector<256x256xf32> to vector<32x256xf32>
    %25 = vector.extract_strided_slice %5 {offsets = [160, 0], sizes = [32, 256], strides = [1, 1]} : vector<256x256xf32> to vector<32x256xf32>
    %26 = arith.subf %10, %25 : vector<32x256xf32>
    %27 = arith.negf %26 : vector<32x256xf32>
    %28 = math.exp %27 : vector<32x256xf32>
    %cst_15 = arith.constant 1.000000e+00 : f32
    %29 = vector.broadcast %cst_15 : f32 to vector<32x256xf32>
    %30 = arith.addf %29, %28 : vector<32x256xf32>
    %31 = arith.divf %29, %30 : vector<32x256xf32>
    %32 = arith.mulf %24, %31 : vector<32x256xf32>
    %33 = arith.addf %22, %32 : vector<32x256xf32>
    %34 = arith.addf %23, %31 : vector<32x256xf32>
    %35 = vector.extract_strided_slice %5 {offsets = [64, 0], sizes = [32, 256], strides = [1, 1]} : vector<256x256xf32> to vector<32x256xf32>
    %36 = vector.extract_strided_slice %5 {offsets = [192, 0], sizes = [32, 256], strides = [1, 1]} : vector<256x256xf32> to vector<32x256xf32>
    %37 = arith.subf %10, %36 : vector<32x256xf32>
    %38 = arith.negf %37 : vector<32x256xf32>
    %39 = math.exp %38 : vector<32x256xf32>
    %cst_16 = arith.constant 1.000000e+00 : f32
    %40 = vector.broadcast %cst_16 : f32 to vector<32x256xf32>
    %41 = arith.addf %40, %39 : vector<32x256xf32>
    %42 = arith.divf %40, %41 : vector<32x256xf32>
    %43 = arith.mulf %35, %42 : vector<32x256xf32>
    %44 = arith.addf %33, %43 : vector<32x256xf32>
    %45 = arith.addf %34, %42 : vector<32x256xf32>
    %46 = vector.extract_strided_slice %5 {offsets = [96, 0], sizes = [32, 256], strides = [1, 1]} : vector<256x256xf32> to vector<32x256xf32>
    %47 = vector.extract_strided_slice %5 {offsets = [224, 0], sizes = [32, 256], strides = [1, 1]} : vector<256x256xf32> to vector<32x256xf32>
    %48 = arith.subf %10, %47 : vector<32x256xf32>
    %49 = arith.negf %48 : vector<32x256xf32>
    %50 = math.exp %49 : vector<32x256xf32>
    %cst_17 = arith.constant 1.000000e+00 : f32
    %51 = vector.broadcast %cst_17 : f32 to vector<32x256xf32>
    %52 = arith.addf %51, %50 : vector<32x256xf32>
    %53 = arith.divf %51, %52 : vector<32x256xf32>
    %54 = arith.mulf %46, %53 : vector<32x256xf32>
    %55 = arith.addf %44, %54 : vector<32x256xf32>
    %56 = arith.addf %45, %53 : vector<32x256xf32>
    %57 = tpu.reciprocal %56 {approx = true} : vector<32x256xf32> -> vector<32x256xf32>
    %58 = arith.mulf %56, %57 : vector<32x256xf32>
    %cst_18 = arith.constant 2.000000e+00 : f32
    %59 = vector.broadcast %cst_18 : f32 to vector<32x256xf32>
    %60 = arith.subf %59, %58 : vector<32x256xf32>
    %61 = arith.mulf %57, %60 : vector<32x256xf32>
    %62 = arith.mulf %55, %61 : vector<32x256xf32>
    %c0_19 = arith.constant 0 : index
    %c0_20 = arith.constant 0 : index
    %63 = vector.load %arg7[%c0_19, %c0_20] : memref<64x32xf32, #tpu.memory_space<vmem>>, vector<64x32xf32>
    %cst_21 = arith.constant dense<0.000000e+00> : vector<64x256xf32>
    %64 = tpu.matmul %63, %62, %cst_21 {dimension_numbers = #tpu.dot_dimension_numbers<[1], [0], [0], [1], [0, 0, 1, 1], [], []>} : vector<64x32xf32>, vector<32x256xf32>, vector<64x256xf32> -> vector<64x256xf32>
    %c0_22 = arith.constant 0 : index
    %c0_23 = arith.constant 0 : index
    %65 = vector.load %arg8[%c0_22, %c0_23] : memref<64x32xf32, #tpu.memory_space<vmem>>, vector<64x32xf32>
    %cst_24 = arith.constant dense<0.000000e+00> : vector<64x256xf32>
    %66 = tpu.matmul %65, %1, %cst_24 {dimension_numbers = #tpu.dot_dimension_numbers<[1], [0], [0], [1], [0, 0, 1, 1], [], []>} : vector<64x32xf32>, vector<32x256xf32>, vector<64x256xf32> -> vector<64x256xf32>
    %67 = arith.addf %64, %66 : vector<64x256xf32>
    %c0_25 = arith.constant 0 : index
    %c0_26 = arith.constant 0 : index
    %68 = vector.load %arg9[%c0_25, %c0_26] : memref<64x1xf32, #tpu.memory_space<vmem>>, vector<64x1xf32>
    %69 = vector.broadcast %68 : vector<64x1xf32> to vector<64x256xf32>
    %70 = arith.addf %67, %69 : vector<64x256xf32>
    %cst_27 = arith.constant 0.000000e+00 : f32
    %71 = vector.broadcast %cst_27 : f32 to vector<64x256xf32>
    %72 = arith.maximumf %70, %71 : vector<64x256xf32>
    %c0_28 = arith.constant 0 : index
    %c0_29 = arith.constant 0 : index
    %c0_30 = arith.constant 0 : index
    %73 = vector.load %arg10[%c0_28, %c0_29, %c0_30] : memref<1x64x256xf32, #tpu.memory_space<vmem>>, vector<1x64x256xf32>
    %74 = vector.shape_cast %73 : vector<1x64x256xf32> to vector<64x256xf32>
    %75 = vector.shape_cast %72 : vector<64x256xf32> to vector<1x64x256xf32>
    tpu.vector_store %arg10[%c0_28, %c0_29, %c0_30], %75 {strides = array<i32>} : memref<1x64x256xf32, #tpu.memory_space<vmem>>, vector<1x64x256xf32>,
    return
  }
  func.func @transform_0(%arg0: i32, %arg1: i32) -> (i32, i32, i32) {
    %c0_i32 = arith.constant 0 : i32
    %c0_i32_0 = arith.constant 0 : i32
    return %arg1, %c0_i32, %arg0 : i32, i32, i32
  }
  func.func @transform_1(%arg0: i32, %arg1: i32) -> (i32, i32) {
    %c0_i32 = arith.constant 0 : i32
    %c0_i32_0 = arith.constant 0 : i32
    return %c0_i32, %arg0 : i32, i32
  }
  func.func @transform_2(%arg0: i32, %arg1: i32) -> (i32, i32, i32) {
    %c0_i32 = arith.constant 0 : i32
    %c0_i32_0 = arith.constant 0 : i32
    %c0_i32_1 = arith.constant 0 : i32
    return %arg1, %c0_i32, %c0_i32_0 : i32, i32, i32
  }
  func.func @transform_3(%arg0: i32, %arg1: i32) -> (i32, i32) {
    %c0_i32 = arith.constant 0 : i32
    %c0_i32_0 = arith.constant 0 : i32
    %c0_i32_1 = arith.constant 0 : i32
    return %c0_i32, %c0_i32_0 : i32, i32
  }
  func.func @transform_4(%arg0: i32, %arg1: i32) -> (i32, i32) {
    %c0_i32 = arith.constant 0 : i32
    %c0_i32_0 = arith.constant 0 : i32
    %c0_i32_1 = arith.constant 0 : i32
    return %c0_i32, %c0_i32_0 : i32, i32
  }
  func.func @transform_5(%arg0: i32, %arg1: i32) -> (i32, i32) {
    %c0_i32 = arith.constant 0 : i32
    %c0_i32_0 = arith.constant 0 : i32
    %c0_i32_1 = arith.constant 0 : i32
    return %c0_i32, %c0_i32_0 : i32, i32
  }
  func.func @transform_6(%arg0: i32, %arg1: i32) -> (i32, i32) {
    %c0_i32 = arith.constant 0 : i32
    %c0_i32_0 = arith.constant 0 : i32
    %c0_i32_1 = arith.constant 0 : i32
    return %c0_i32, %c0_i32_0 : i32, i32
  }
  func.func @transform_7(%arg0: i32, %arg1: i32) -> (i32, i32) {
    %c0_i32 = arith.constant 0 : i32
    %c0_i32_0 = arith.constant 0 : i32
    %c0_i32_1 = arith.constant 0 : i32
    return %c0_i32, %c0_i32_0 : i32, i32
  }
  func.func @transform_8(%arg0: i32, %arg1: i32) -> (i32, i32, i32) {
    %c0_i32 = arith.constant 0 : i32
    %c0_i32_0 = arith.constant 0 : i32
    return %arg1, %c0_i32, %arg0 : i32, i32, i32
  }
}

</mosaic_0001>

<llo_original>
// kernel: tpu_custom_call.1
$region0: #{tpu_custom_call.1}
  #allocation0 [shape = 'u32[]', space=smem, size = 0x4, offset = 0x4, fixed_abs, tag = 'smem constant byte address 0x4 - core index']
  #allocation1 [shape = 'u32[72,128]{1,0:T(1,128)}', space=vmem, size = 0x9000, scoped, tag = 'internal scratch']
  %s0 = inlined_call_operand.vmem [shape: f32[2,32,256], index: 0, kind: input, shape index: {}]
  %s1 = inlined_call_operand.vmem [shape: f32[64,256], index: 1, kind: input, shape index: {}]
  %s2 = inlined_call_operand.vmem [shape: f32[2,256,64], index: 2, kind: input, shape index: {}]
  %s3 = inlined_call_operand.vmem [shape: f32[32,32], index: 3, kind: input, shape index: {}]
  %s4 = inlined_call_operand.vmem [shape: f32[32,1], index: 4, kind: input, shape index: {}]
  %s5 = inlined_call_operand.vmem [shape: f32[64,32], index: 5, kind: input, shape index: {}]
  %s6 = inlined_call_operand.vmem [shape: f32[64,32], index: 6, kind: input, shape index: {}]
  %s7 = inlined_call_operand.vmem [shape: f32[64,1], index: 7, kind: input, shape index: {}]
  %s8 = inlined_call_operand.hbm [shape: f32[2,64,256], index: 8, kind: output, shape index: {}]
  %s9 = sld [smem:[#allocation0]]
  $region65: #{tpu_custom_call.1} parent=0
    _
  %s11 = ssub.s32 1, %s9
  %s12 = scalar_select 0, %s11, %s9
  $region1: #{tpu_custom_call.1} parent=0
    #allocation2 [shape = 'u8[131072]{0}', space=vmem, size = 0x20000, scoped, tag = 'output window, operand 0']
    #allocation3 [shape = 's32[2]{0}', space=sflag, size = 0x8, scoped, tag = 'scoped memory for tpu_custom_call.1']
    %13 = vsyncpa [#allocation3], 0
    %s14 = scalar_lea.sflag [#allocation3], 1
    %15 = vsyncpa %s14, 0
    loop: start=0, step=1, limit=4
    $region2: #{tpu_custom_call.1} parent=1 // loop_pre_header
      _
    $region3: #{tpu_custom_call.1} parent=1 // loop_header
      %s17 = sphi 0, %s21
      %p18 = scmp.ge.s32.totalorder %s17, 4
      %s24 = sphi 0, %s36
      %s25 = sphi 0, %s32
      %s26 = sphi 0, %s24
      %s27 = sphi 0, %s25
      %s28 = sphi 0, %s26
      %s29 = sphi 0, %s27
      %s41 = sphi 0, %s43
      %s44 = sphi 0, %s41
      %s45 = sphi 0, %s44
      %s61 = sphi 0, %s45
      %s67 = sphi 0, %s69
      %s70 = sphi 0, %s67
      %s71 = sphi 0, %s70
      %s87 = sphi 0, %s71
      %s93 = sphi 0, %s95
      %s96 = sphi 0, %s93
      %s97 = sphi 0, %s96
      %s113 = sphi 0, %s97
      %s117 = sphi 0, %s117
      %s119 = sphi 0, %s117
      %s120 = sphi 0, %s119
      %s134 = sphi 0, %s120
      %s138 = sphi 0, %s138
      %s140 = sphi 0, %s138
      %s141 = sphi 0, %s140
      %s155 = sphi 0, %s141
      %s159 = sphi 0, %s159
      %s161 = sphi 0, %s159
      %s162 = sphi 0, %s161
      %s176 = sphi 0, %s162
      %s180 = sphi 0, %s180
      %s182 = sphi 0, %s180
      %s183 = sphi 0, %s182
      %s197 = sphi 0, %s183
      %s201 = sphi 0, %s201
      %s203 = sphi 0, %s201
      %s204 = sphi 0, %s203
      %s218 = sphi 0, %s204
      %s226 = sphi 0, %s228
      %s229 = sphi 0, %s226
      %s230 = sphi 0, %s229
      %s246 = sphi 0, %s230
    $region4: #{tpu_custom_call.1} parent=1 // loop_header_branch
      %20 = sbr.rel (%p18) target = $region8
    $region5: #{tpu_custom_call.1} parent=1 // loop_body
      %s22 = ssub.s32 %s17, 1
      %s23 = ssub.s32 %s17, 2
      %s30 = sadd.s32 1, %s25
      %p31 = scmp.ge.s32.totalorder %s30, 2
      %s32 = scalar_select %p31, 0, %s30
      %s33 = sadd.s32 1, %s24
      %s34 = scalar_select %p31, %s33, %s24
      %p35 = scmp.ge.s32.totalorder %s34, 1
      %s36 = scalar_select %p35, 0, %s34
      %s37 = ssub.s32 %s25, %s32
      %s38 = ssub.s32 %s24, %s36
      %s39 = sor.u32 %s37, %s38
      %p40 = scmp.eq.s32.totalorder %s39, 0
      %s42 = sadd.s32 %s41, 1
      %s43 = scalar_select %p40, %s41, %s42
      %p46 = pneg %p40
      %p47 = scmp.eq.s32.totalorder %s17, 1
      %p48 = por %p46, %p47
      %p49 = scmp.ne.s32.totalorder %s41, %s44
      %p50 = scmp.eq.s32.totalorder %s17, 0
      %p51 = por %p49, %p50
      %p52 = scmp.ne.s32.totalorder %s41, %s44
      %p53 = scmp.eq.s32.totalorder %s22, 1
      %p54 = por %p52, %p53
      %p55 = scmp.ne.s32.totalorder %s44, %s45
      %p56 = scmp.eq.s32.totalorder %s22, 0
      %p57 = por %p55, %p56
      %p58 = scmp.ne.s32.totalorder %s44, %s45
      %p59 = scmp.eq.s32.totalorder %s23, 1
      %p60 = por %p58, %p59
      %p62 = scmp.ne.s32.totalorder %s45, %s61
      %p63 = scmp.eq.s32.totalorder %s23, 0
      %p64 = por %p62, %p63
      %s65 = ssub.s32 %s24, %s36
      %p66 = scmp.eq.s32.totalorder %s65, 0
      %s68 = sadd.s32 %s67, 1
      %s69 = scalar_select %p66, %s67, %s68
      %p72 = pneg %p66
      %p73 = scmp.eq.s32.totalorder %s17, 1
      %p74 = por %p72, %p73
      %p75 = scmp.ne.s32.totalorder %s67, %s70
      %p76 = scmp.eq.s32.totalorder %s17, 0
      %p77 = por %p75, %p76
      %p78 = scmp.ne.s32.totalorder %s67, %s70
      %p79 = scmp.eq.s32.totalorder %s22, 1
      %p80 = por %p78, %p79
      %p81 = scmp.ne.s32.totalorder %s70, %s71
      %p82 = scmp.eq.s32.totalorder %s22, 0
      %p83 = por %p81, %p82
      %p84 = scmp.ne.s32.totalorder %s70, %s71
      %p85 = scmp.eq.s32.totalorder %s23, 1
      %p86 = por %p84, %p85
      %p88 = scmp.ne.s32.totalorder %s71, %s87
      %p89 = scmp.eq.s32.totalorder %s23, 0
      %p90 = por %p88, %p89
      %s91 = ssub.s32 %s25, %s32
      %p92 = scmp.eq.s32.totalorder %s91, 0
      %s94 = sadd.s32 %s93, 1
      %s95 = scalar_select %p92, %s93, %s94
      %p98 = pneg %p92
      %p99 = scmp.eq.s32.totalorder %s17, 1
      %p100 = por %p98, %p99
      %p101 = scmp.ne.s32.totalorder %s93, %s96
      %p102 = scmp.eq.s32.totalorder %s17, 0
      %p103 = por %p101, %p102
      %p104 = scmp.ne.s32.totalorder %s93, %s96
      %p105 = scmp.eq.s32.totalorder %s22, 1
      %p106 = por %p104, %p105
      %p107 = scmp.ne.s32.totalorder %s96, %s97
      %p108 = scmp.eq.s32.totalorder %s22, 0
      %p109 = por %p107, %p108
      %p110 = scmp.ne.s32.totalorder %s96, %s97
      %p111 = scmp.eq.s32.totalorder %s23, 1
      %p112 = por %p110, %p111
      %p114 = scmp.ne.s32.totalorder %s97, %s113
      %p115 = scmp.eq.s32.totalorder %s23, 0
      %p116 = por %p114, %p115
      %s118 = sadd.s32 %s117, 1
      %p121 = scmp.eq.s32.totalorder %s17, 1
      %p122 = scmp.ne.s32.totalorder %s117, %s119
      %p123 = scmp.eq.s32.totalorder %s17, 0
      %p124 = por %p122, %p123
      %p125 = scmp.ne.s32.totalorder %s117, %s119
      %p126 = scmp.eq.s32.totalorder %s22, 1
      %p127 = por %p125, %p126
      %p128 = scmp.ne.s32.totalorder %s119, %s120
      %p129 = scmp.eq.s32.totalorder %s22, 0
      %p130 = por %p128, %p129
      %p131 = scmp.ne.s32.totalorder %s119, %s120
      %p132 = scmp.eq.s32.totalorder %s23, 1
      %p133 = por %p131, %p132
      %p135 = scmp.ne.s32.totalorder %s120, %s134
      %p136 = scmp.eq.s32.totalorder %s23, 0
      %p137 = por %p135, %p136
      %s139 = sadd.s32 %s138, 1
      %p142 = scmp.eq.s32.totalorder %s17, 1
      %p143 = scmp.ne.s32.totalorder %s138, %s140
      %p144 = scmp.eq.s32.totalorder %s17, 0
      %p145 = por %p143, %p144
      %p146 = scmp.ne.s32.totalorder %s138, %s140
      %p147 = scmp.eq.s32.totalorder %s22, 1
      %p148 = por %p146, %p147
      %p149 = scmp.ne.s32.totalorder %s140, %s141
      %p150 = scmp.eq.s32.totalorder %s22, 0
      %p151 = por %p149, %p150
      %p152 = scmp.ne.s32.totalorder %s140, %s141
      %p153 = scmp.eq.s32.totalorder %s23, 1
      %p154 = por %p152, %p153
      %p156 = scmp.ne.s32.totalorder %s141, %s155
      %p157 = scmp.eq.s32.totalorder %s23, 0
      %p158 = por %p156, %p157
      %s160 = sadd.s32 %s159, 1
      %p163 = scmp.eq.s32.totalorder %s17, 1
      %p164 = scmp.ne.s32.totalorder %s159, %s161
      %p165 = scmp.eq.s32.totalorder %s17, 0
      %p166 = por %p164, %p165
      %p167 = scmp.ne.s32.totalorder %s159, %s161
      %p168 = scmp.eq.s32.totalorder %s22, 1
      %p169 = por %p167, %p168
      %p170 = scmp.ne.s32.totalorder %s161, %s162
      %p171 = scmp.eq.s32.totalorder %s22, 0
      %p172 = por %p170, %p171
      %p173 = scmp.ne.s32.totalorder %s161, %s162
      %p174 = scmp.eq.s32.totalorder %s23, 1
      %p175 = por %p173, %p174
      %p177 = scmp.ne.s32.totalorder %s162, %s176
      %p178 = scmp.eq.s32.totalorder %s23, 0
      %p179 = por %p177, %p178
      %s181 = sadd.s32 %s180, 1
      %p184 = scmp.eq.s32.totalorder %s17, 1
      %p185 = scmp.ne.s32.totalorder %s180, %s182
      %p186 = scmp.eq.s32.totalorder %s17, 0
      %p187 = por %p185, %p186
      %p188 = scmp.ne.s32.totalorder %s180, %s182
      %p189 = scmp.eq.s32.totalorder %s22, 1
      %p190 = por %p188, %p189
      %p191 = scmp.ne.s32.totalorder %s182, %s183
      %p192 = scmp.eq.s32.totalorder %s22, 0
      %p193 = por %p191, %p192
      %p194 = scmp.ne.s32.totalorder %s182, %s183
      %p195 = scmp.eq.s32.totalorder %s23, 1
      %p196 = por %p194, %p195
      %p198 = scmp.ne.s32.totalorder %s183, %s197
      %p199 = scmp.eq.s32.totalorder %s23, 0
      %p200 = por %p198, %p199
      %s202 = sadd.s32 %s201, 1
      %p205 = scmp.eq.s32.totalorder %s17, 1
      %p206 = scmp.ne.s32.totalorder %s201, %s203
      %p207 = scmp.eq.s32.totalorder %s17, 0
      %p208 = por %p206, %p207
      %p209 = scmp.ne.s32.totalorder %s201, %s203
      %p210 = scmp.eq.s32.totalorder %s22, 1
      %p211 = por %p209, %p210
      %p212 = scmp.ne.s32.totalorder %s203, %s204
      %p213 = scmp.eq.s32.totalorder %s22, 0
      %p214 = por %p212, %p213
      %p215 = scmp.ne.s32.totalorder %s203, %s204
      %p216 = scmp.eq.s32.totalorder %s23, 1
      %p217 = por %p215, %p216
      %p219 = scmp.ne.s32.totalorder %s204, %s218
      %p220 = scmp.eq.s32.totalorder %s23, 0
      %p221 = por %p219, %p220
      %s222 = ssub.s32 %s25, %s32
      %s223 = ssub.s32 %s24, %s36
      %s224 = sor.u32 %s222, %s223
      %p225 = scmp.eq.s32.totalorder %s224, 0
      %s227 = sadd.s32 %s226, 1
      %s228 = scalar_select %p225, %s226, %s227
      %p231 = pneg %p225
      %p232 = scmp.eq.s32.totalorder %s17, 1
      %p233 = por %p231, %p232
      %p234 = scmp.ne.s32.totalorder %s226, %s229
      %p235 = scmp.eq.s32.totalorder %s17, 0
      %p236 = por %p234, %p235
      %p237 = scmp.ne.s32.totalorder %s226, %s229
      %p238 = scmp.eq.s32.totalorder %s22, 1
      %p239 = por %p237, %p238
      %p240 = scmp.ne.s32.totalorder %s229, %s230
      %p241 = scmp.eq.s32.totalorder %s22, 0
      %p242 = por %p240, %p241
      %p243 = scmp.ne.s32.totalorder %s229, %s230
      %p244 = scmp.eq.s32.totalorder %s23, 1
      %p245 = por %p243, %p244
      %p247 = scmp.ne.s32.totalorder %s230, %s246
      %p248 = scmp.eq.s32.totalorder %s23, 0
      %p249 = por %p247, %p248
      %p250 = scmp.le.s32.totalorder 1, %s17
      %p251 = scmp.lt.s32.totalorder %s17, 3
      %p252 = pnand %p250, %p251
      %p253 = pneg %p252
      // Predicated region
      $region9: #{tpu_custom_call.1} parent=5 // pred_check
        _
      $region10: #{tpu_custom_call.1} parent=5 // pred_check_branch
        %255 = sbr.rel (%p252) target = $region12
      $region11: #{tpu_custom_call.1} parent=5 // pred_region
        %s256 = ssub.s32 %s17, 1
        // Predicated region
        $region13: #{tpu_custom_call.1} parent=11 // pred_check
          %p257 = pneg %p83
        $region14: #{tpu_custom_call.1} parent=11 // pred_check_branch
          %259 = sbr.rel (%p257) target = $region16
        $region15: #{tpu_custom_call.1} parent=11 // pred_region
          %s260 = smul.u32 2, %s26
          %p261 = scmp.lt.s32.totalorder %s260, 1
          %s262 = scalar_select %p261, %s260, 1
          %s263 = smul.addr %s262, 8
          %s264 = scalar_lea.vmem %s1, %s263
          %s265 = smul.u32 2, %s26
        $region16: #{tpu_custom_call.1} parent=11 // pred_fallthru
          _
        // Predicated region
        $region17: #{tpu_custom_call.1} parent=11 // pred_check
          %p266 = pneg %p130
        $region18: #{tpu_custom_call.1} parent=11 // pred_check_branch
          %268 = sbr.rel (%p266) target = $region20
        $region19: #{tpu_custom_call.1} parent=11 // pred_region
          _
        $region20: #{tpu_custom_call.1} parent=11 // pred_fallthru
          _
        // Predicated region
        $region21: #{tpu_custom_call.1} parent=11 // pred_check
          %p269 = pneg %p151
        $region22: #{tpu_custom_call.1} parent=11 // pred_check_branch
          %271 = sbr.rel (%p269) target = $region24
        $region23: #{tpu_custom_call.1} parent=11 // pred_region
          _
        $region24: #{tpu_custom_call.1} parent=11 // pred_fallthru
          _
        // Predicated region
        $region25: #{tpu_custom_call.1} parent=11 // pred_check
          %p272 = pneg %p172
        $region26: #{tpu_custom_call.1} parent=11 // pred_check_branch
          %274 = sbr.rel (%p272) target = $region28
        $region27: #{tpu_custom_call.1} parent=11 // pred_region
          _
        $region28: #{tpu_custom_call.1} parent=11 // pred_fallthru
          _
        // Predicated region
        $region29: #{tpu_custom_call.1} parent=11 // pred_check
          %p275 = pneg %p193
        $region30: #{tpu_custom_call.1} parent=11 // pred_check_branch
          %277 = sbr.rel (%p275) target = $region32
        $region31: #{tpu_custom_call.1} parent=11 // pred_region
          _
        $region32: #{tpu_custom_call.1} parent=11 // pred_fallthru
          _
        // Predicated region
        $region33: #{tpu_custom_call.1} parent=11 // pred_check
          %p278 = pneg %p214
        $region34: #{tpu_custom_call.1} parent=11 // pred_check_branch
          %280 = sbr.rel (%p278) target = $region36
        $region35: #{tpu_custom_call.1} parent=11 // pred_region
          _
        $region36: #{tpu_custom_call.1} parent=11 // pred_fallthru
          _
      $region12: #{tpu_custom_call.1} parent=5 // pred_fallthru
        _
      %p281 = scmp.lt.s32.totalorder %s17, 2
      // Predicated region
      $region37: #{tpu_custom_call.1} parent=5 // pred_check
        %p282 = pneg %p281
      $region38: #{tpu_custom_call.1} parent=5 // pred_check_branch
        %284 = sbr.rel (%p282) target = $region40
      $region39: #{tpu_custom_call.1} parent=5 // pred_region
        // Predicated region
        $region41: #{tpu_custom_call.1} parent=39 // pred_check
          %p285 = pneg %p51
        $region42: #{tpu_custom_call.1} parent=39 // pred_check_branch
          %287 = sbr.rel (%p285) target = $region44
        $region43: #{tpu_custom_call.1} parent=39 // pred_region
          %s288 = smul.u32 2, %s24
          %p289 = scmp.lt.s32.totalorder %s25, 1
          %s290 = scalar_select %p289, %s25, 1
          %p291 = scmp.lt.s32.totalorder %s288, 1
          %s292 = scalar_select %p291, %s288, 1
          %s293 = smul.addr %s290, 8
          %s294 = sadd.s32 %s292, %s293
          %s295 = smul.addr %s294, 8
          %s296 = scalar_lea.vmem %s0, %s295
          %s297 = smul.u32 2, %s24
        $region44: #{tpu_custom_call.1} parent=39 // pred_fallthru
          _
        // Predicated region
        $region45: #{tpu_custom_call.1} parent=39 // pred_check
          %p298 = pneg %p103
        $region46: #{tpu_custom_call.1} parent=39 // pred_check_branch
          %300 = sbr.rel (%p298) target = $region48
        $region47: #{tpu_custom_call.1} parent=39 // pred_region
          %p301 = scmp.lt.s32.totalorder %s25, 1
          %s302 = scalar_select %p301, %s25, 1
          %s303 = smul.addr %s302, 32
          %s304 = smul.addr %s303, 8
          %s305 = scalar_lea.vmem %s2, %s304
        $region48: #{tpu_custom_call.1} parent=39 // pred_fallthru
          _
      $region40: #{tpu_custom_call.1} parent=5 // pred_fallthru
        _
      %p306 = scmp.le.s32.totalorder 1, %s17
      %p307 = scmp.lt.s32.totalorder %s17, 3
      %p308 = pnand %p306, %p307
      %p309 = pneg %p308
      // Predicated region
      $region49: #{tpu_custom_call.1} parent=5 // pred_check
        _
      $region50: #{tpu_custom_call.1} parent=5 // pred_check_branch
        %311 = sbr.rel (%p308) target = $region52
      $region51: #{tpu_custom_call.1} parent=5 // pred_region
        %s312 = ssub.s32 %s17, 1
        %s313 = smul.u32 2, %s26
        %p314 = scmp.lt.s32.totalorder %s27, 1
        %s315 = scalar_select %p314, %s27, 1
        %p316 = scmp.lt.s32.totalorder %s313, 1
        %s317 = scalar_select %p316, %s313, 1
        %s318 = smul.addr %s315, 8
        %s319 = sadd.s32 %s317, %s318
        %s320 = smul.addr %s319, 8
        %s321 = scalar_lea.vmem %s0, %s320
        %p322 = pneg %p57
        %p323 = pneg %p54
        %s324 = smul.u32 2, %s26
        %p325 = scmp.lt.s32.totalorder %s324, 1
        %s326 = scalar_select %p325, %s324, 1
        %s327 = smul.addr %s326, 8
        %s328 = scalar_lea.vmem %s1, %s327
        %p329 = pneg %p83
        %p330 = pneg %p80
        %p331 = scmp.lt.s32.totalorder %s27, 1
        %s332 = scalar_select %p331, %s27, 1
        %s333 = smul.addr %s332, 32
        %s334 = smul.addr %s333, 8
        %s335 = scalar_lea.vmem %s2, %s334
        %p336 = pneg %p109
        %p337 = pneg %p106
        %p338 = pneg %p130
        %p339 = pneg %p127
        %p340 = pneg %p151
        %p341 = pneg %p148
        %p342 = pneg %p172
        %p343 = pneg %p169
        %p344 = pneg %p193
        %p345 = pneg %p190
        %p346 = pneg %p214
        %p347 = pneg %p211
        %p348 = pneg %p242
        %p349 = pneg %p239
        %s350 = sand.u32 %s229, 1
        %s351 = scalar_lea.sflag [#allocation3], %s350
        %s352 = sand.u32 %s229, 1
        %s353 = smul.addr %s352, 128
        %s354 = scalar_lea.vmem [#allocation2], %s353
        %s355 = smul.u32 2, %s26
        %p356 = scmp.lt.s32.totalorder %s27, 1
        %s357 = scalar_select %p356, %s27, 1
        %p358 = scmp.lt.s32.totalorder %s355, 1
        %s359 = scalar_select %p358, %s355, 1
        %s360 = smul.addr %s357, 8
        %s361 = sadd.s32 %s359, %s360
        %s362 = smul.addr %s361, 8
        %s363 = scalar_lea.vmem %s0, %s362
        %s364 = smul.u32 2, %s26
        %s365 = smul.u32 2, %s26
        %p366 = scmp.lt.s32.totalorder %s365, 1
        %s367 = scalar_select %p366, %s365, 1
        %s368 = smul.addr %s367, 8
        %s369 = scalar_lea.vmem %s1, %s368
        %s370 = smul.u32 2, %s26
        %p371 = scmp.lt.s32.totalorder %s27, 1
        %s372 = scalar_select %p371, %s27, 1
        %s373 = smul.addr %s372, 32
        %s374 = smul.addr %s373, 8
        %s375 = scalar_lea.vmem %s2, %s374
        %s376 = smul.u32 2, %s26
        %v377 = vld [vmem:[%s363] sm:$0xff]
        %v378 = vld [vmem:[%s363 + $0x8] sm:$0xff]
        %v379 = vld [vmem:[%s363 + $0x10] sm:$0xff]
        %v380 = vld [vmem:[%s363 + $0x18] sm:$0xff]
        %v381 = vld [vmem:[%s363 + $0x20] sm:$0xff]
        %v382 = vld [vmem:[%s363 + $0x28] sm:$0xff]
        %v383 = vld [vmem:[%s363 + $0x30] sm:$0xff]
        %v384 = vld [vmem:[%s363 + $0x38] sm:$0xff]
        %v385 = vld [vmem:[%s369] sm:$0xff]
        %v386 = vld [vmem:[%s369 + $0x8] sm:$0xff]
        %v387 = vld [vmem:[%s369 + $0x10] sm:$0xff]
        %v388 = vld [vmem:[%s369 + $0x18] sm:$0xff]
        %v389 = vld [vmem:[%s369 + $0x20] sm:$0xff]
        %v390 = vld [vmem:[%s369 + $0x28] sm:$0xff]
        %v391 = vld [vmem:[%s369 + $0x30] sm:$0xff]
        %v392 = vld [vmem:[%s369 + $0x38] sm:$0xff]
        %v393 = vld [vmem:[%s369 + $0x40] sm:$0xff]
        %v394 = vld [vmem:[%s369 + $0x48] sm:$0xff]
        %v395 = vld [vmem:[%s369 + $0x50] sm:$0xff]
        %v396 = vld [vmem:[%s369 + $0x58] sm:$0xff]
        %v397 = vld [vmem:[%s369 + $0x60] sm:$0xff]
        %v398 = vld [vmem:[%s369 + $0x68] sm:$0xff]
        %v399 = vld [vmem:[%s369 + $0x70] sm:$0xff]
        %v400 = vld [vmem:[%s369 + $0x78] sm:$0xff]
        %v401 = vld [vmem:[%s375] sm:$0xff]
        %v402 = vld [vmem:[%s375 + $0x8] sm:$0xff]
        %v403 = vld [vmem:[%s375 + $0x10] sm:$0xff]
        %v404 = vld [vmem:[%s375 + $0x18] sm:$0xff]
        %v405 = vld [vmem:[%s375 + $0x20] sm:$0xff]
        %v406 = vld [vmem:[%s375 + $0x28] sm:$0xff]
        %v407 = vld [vmem:[%s375 + $0x30] sm:$0xff]
        %v408 = vld [vmem:[%s375 + $0x38] sm:$0xff]
        %v409 = vld [vmem:[%s375 + $0x40] sm:$0xff]
        %v410 = vld [vmem:[%s375 + $0x48] sm:$0xff]
        %v411 = vld [vmem:[%s375 + $0x50] sm:$0xff]
        %v412 = vld [vmem:[%s375 + $0x58] sm:$0xff]
        %v413 = vld [vmem:[%s375 + $0x60] sm:$0xff]
        %v414 = vld [vmem:[%s375 + $0x68] sm:$0xff]
        %v415 = vld [vmem:[%s375 + $0x70] sm:$0xff]
        %v416 = vld [vmem:[%s375 + $0x78] sm:$0xff]
        %v417 = vld [vmem:[%s375 + $0x80] sm:$0xff]
        %v418 = vld [vmem:[%s375 + $0x88] sm:$0xff]
        %v419 = vld [vmem:[%s375 + $0x90] sm:$0xff]
        %v420 = vld [vmem:[%s375 + $0x98] sm:$0xff]
        %v421 = vld [vmem:[%s375 + $0xa0] sm:$0xff]
        %v422 = vld [vmem:[%s375 + $0xa8] sm:$0xff]
        %v423 = vld [vmem:[%s375 + $0xb0] sm:$0xff]
        %v424 = vld [vmem:[%s375 + $0xb8] sm:$0xff]
        %v425 = vld [vmem:[%s375 + $0xc0] sm:$0xff]
        %v426 = vld [vmem:[%s375 + $0xc8] sm:$0xff]
        %v427 = vld [vmem:[%s375 + $0xd0] sm:$0xff]
        %v428 = vld [vmem:[%s375 + $0xd8] sm:$0xff]
        %v429 = vld [vmem:[%s375 + $0xe0] sm:$0xff]
        %v430 = vld [vmem:[%s375 + $0xe8] sm:$0xff]
        %v431 = vld [vmem:[%s375 + $0xf0] sm:$0xff]
        %v432 = vld [vmem:[%s375 + $0xf8] sm:$0xff]
        %vm433 = vcmask 523264
        %v435 = vsel %vm433, %v401, 0
        %v438 = vsel %vm433, %v402, 0
        %v441 = vsel %vm433, %v403, 0
        %v444 = vsel %vm433, %v404, 0
        %v447 = vsel %vm433, %v405, 0
        %v450 = vsel %vm433, %v406, 0
        %v453 = vsel %vm433, %v407, 0
        %v456 = vsel %vm433, %v408, 0
        %v459 = vsel %vm433, %v409, 0
        %v462 = vsel %vm433, %v410, 0
        %v465 = vsel %vm433, %v411, 0
        %v468 = vsel %vm433, %v412, 0
        %v471 = vsel %vm433, %v413, 0
        %v474 = vsel %vm433, %v414, 0
        %v477 = vsel %vm433, %v415, 0
        %v480 = vsel %vm433, %v416, 0
        %v483 = vsel %vm433, %v417, 0
        %v486 = vsel %vm433, %v418, 0
        %v489 = vsel %vm433, %v419, 0
        %v492 = vsel %vm433, %v420, 0
        %v495 = vsel %vm433, %v421, 0
        %v498 = vsel %vm433, %v422, 0
        %v501 = vsel %vm433, %v423, 0
        %v504 = vsel %vm433, %v424, 0
        %v507 = vsel %vm433, %v425, 0
        %v510 = vsel %vm433, %v426, 0
        %v513 = vsel %vm433, %v427, 0
        %v516 = vsel %vm433, %v428, 0
        %v519 = vsel %vm433, %v429, 0
        %v522 = vsel %vm433, %v430, 0
        %v525 = vsel %vm433, %v431, 0
        %v528 = vsel %vm433, %v432, 0
        %530 = vmatpush.msra.mxu0 0.0
        %531 = vmatpush.msra.mxu0 0.0
        %532 = vmatpush.msra.mxu0 0.0
        %533 = vmatpush.msra.mxu0 0.0
        %534 = vmatpush.msra.mxu0 0.0
        %535 = vmatpush.msra.mxu0 0.0
        %536 = vmatpush.msra.mxu0 0.0
        %537 = vmatpush.msra.mxu0 0.0
        %538 = vmatpush.msra.mxu0 %v399
        %539 = vmatpush.msra.mxu0 %v397
        %540 = vmatpush.msra.mxu0 %v395
        %541 = vmatpush.msra.mxu0 %v393
        %542 = vmatpush.msra.mxu0 %v391
        %543 = vmatpush.msra.mxu0 %v389
        %544 = vmatpush.msra.mxu0 %v387
        %545 = vmatpush.msra.mxu0 %v385
        %546 = vmatmul.f32.gmra.mxu0 %v435
        %v547 = vpop.f32.mrf.mxu0
        %v548 = vadd.f32 0.0, %v547
        %549 = vmatmul.f32.gmra.mxu0 %v438
        %v550 = vpop.f32.mrf.mxu0
        %v551 = vadd.f32 0.0, %v550
        %552 = vmatmul.f32.gmra.mxu0 %v441
        %v553 = vpop.f32.mrf.mxu0
        %v554 = vadd.f32 0.0, %v553
        %555 = vmatmul.f32.gmra.mxu0 %v444
        %v556 = vpop.f32.mrf.mxu0
        %v557 = vadd.f32 0.0, %v556
        %558 = vmatmul.f32.gmra.mxu0 %v447
        %v559 = vpop.f32.mrf.mxu0
        %v560 = vadd.f32 0.0, %v559
        %561 = vmatmul.f32.gmra.mxu0 %v450
        %v562 = vpop.f32.mrf.mxu0
        %v563 = vadd.f32 0.0, %v562
        %564 = vmatmul.f32.gmra.mxu0 %v453
        %v565 = vpop.f32.mrf.mxu0
        %v566 = vadd.f32 0.0, %v565
        %567 = vmatmul.f32.gmra.mxu0 %v456
        %v568 = vpop.f32.mrf.mxu0
        %v569 = vadd.f32 0.0, %v568
        %570 = vmatmul.f32.gmra.mxu0 %v459
        %v571 = vpop.f32.mrf.mxu0
        %v572 = vadd.f32 0.0, %v571
        %573 = vmatmul.f32.gmra.mxu0 %v462
        %v574 = vpop.f32.mrf.mxu0
        %v575 = vadd.f32 0.0, %v574
        %576 = vmatmul.f32.gmra.mxu0 %v465
        %v577 = vpop.f32.mrf.mxu0
        %v578 = vadd.f32 0.0, %v577
        %579 = vmatmul.f32.gmra.mxu0 %v468
        %v580 = vpop.f32.mrf.mxu0
        %v581 = vadd.f32 0.0, %v580
        %582 = vmatmul.f32.gmra.mxu0 %v471
        %v583 = vpop.f32.mrf.mxu0
        %v584 = vadd.f32 0.0, %v583
        %585 = vmatmul.f32.gmra.mxu0 %v474
        %v586 = vpop.f32.mrf.mxu0
        %v587 = vadd.f32 0.0, %v586
        %588 = vmatmul.f32.gmra.mxu0 %v477
        %v589 = vpop.f32.mrf.mxu0
        %v590 = vadd.f32 0.0, %v589
        %591 = vmatmul.f32.gmra.mxu0 %v480
        %v592 = vpop.f32.mrf.mxu0
        %v593 = vadd.f32 0.0, %v592
        %594 = vmatmul.f32.gmra.mxu0 %v483
        %v595 = vpop.f32.mrf.mxu0
        %v596 = vadd.f32 0.0, %v595
        %597 = vmatmul.f32.gmra.mxu0 %v486
        %v598 = vpop.f32.mrf.mxu0
        %v599 = vadd.f32 0.0, %v598
        %600 = vmatmul.f32.gmra.mxu0 %v489
        %v601 = vpop.f32.mrf.mxu0
        %v602 = vadd.f32 0.0, %v601
        %603 = vmatmul.f32.gmra.mxu0 %v492
        %v604 = vpop.f32.mrf.mxu0
        %v605 = vadd.f32 0.0, %v604
        %606 = vmatmul.f32.gmra.mxu0 %v495
        %v607 = vpop.f32.mrf.mxu0
        %v608 = vadd.f32 0.0, %v607
        %609 = vmatmul.f32.gmra.mxu0 %v498
        %v610 = vpop.f32.mrf.mxu0
        %v611 = vadd.f32 0.0, %v610
        %612 = vmatmul.f32.gmra.mxu0 %v501
        %v613 = vpop.f32.mrf.mxu0
        %v614 = vadd.f32 0.0, %v613
        %615 = vmatmul.f32.gmra.mxu0 %v504
        %v616 = vpop.f32.mrf.mxu0
        %v617 = vadd.f32 0.0, %v616
        %618 = vmatmul.f32.gmra.mxu0 %v507
        %v619 = vpop.f32.mrf.mxu0
        %v620 = vadd.f32 0.0, %v619
        %621 = vmatmul.f32.gmra.mxu0 %v510
        %v622 = vpop.f32.mrf.mxu0
        %v623 = vadd.f32 0.0, %v622
        %624 = vmatmul.f32.gmra.mxu0 %v513
        %v625 = vpop.f32.mrf.mxu0
        %v626 = vadd.f32 0.0, %v625
        %627 = vmatmul.f32.gmra.mxu0 %v516
        %v628 = vpop.f32.mrf.mxu0
        %v629 = vadd.f32 0.0, %v628
        %630 = vmatmul.f32.gmra.mxu0 %v519
        %v631 = vpop.f32.mrf.mxu0
        %v632 = vadd.f32 0.0, %v631
        %633 = vmatmul.f32.gmra.mxu0 %v522
        %v634 = vpop.f32.mrf.mxu0
        %v635 = vadd.f32 0.0, %v634
        %636 = vmatmul.f32.gmra.mxu0 %v525
        %v637 = vpop.f32.mrf.mxu0
        %v638 = vadd.f32 0.0, %v637
        %639 = vmatmul.f32.gmra.mxu0 %v528
        %v640 = vpop.f32.mrf.mxu0
        %v641 = vadd.f32 0.0, %v640
        %642 = vdwg.mxu0
        %643 = vmatpush.msra.mxu0 0.0
        %644 = vmatpush.msra.mxu0 0.0
        %645 = vmatpush.msra.mxu0 0.0
        %646 = vmatpush.msra.mxu0 0.0
        %647 = vmatpush.msra.mxu0 0.0
        %648 = vmatpush.msra.mxu0 0.0
        %649 = vmatpush.msra.mxu0 0.0
        %650 = vmatpush.msra.mxu0 0.0
        %651 = vmatpush.msra.mxu0 %v400
        %652 = vmatpush.msra.mxu0 %v398
        %653 = vmatpush.msra.mxu0 %v396
        %654 = vmatpush.msra.mxu0 %v394
        %655 = vmatpush.msra.mxu0 %v392
        %656 = vmatpush.msra.mxu0 %v390
        %657 = vmatpush.msra.mxu0 %v388
        %658 = vmatpush.msra.mxu0 %v386
        %659 = vmatmul.f32.gmra.mxu0 %v435
        %v660 = vpop.f32.mrf.mxu0
        %v661 = vadd.f32 0.0, %v660
        %662 = vmatmul.f32.gmra.mxu0 %v438
        %v663 = vpop.f32.mrf.mxu0
        %v664 = vadd.f32 0.0, %v663
        %665 = vmatmul.f32.gmra.mxu0 %v441
        %v666 = vpop.f32.mrf.mxu0
        %v667 = vadd.f32 0.0, %v666
        %668 = vmatmul.f32.gmra.mxu0 %v444
        %v669 = vpop.f32.mrf.mxu0
        %v670 = vadd.f32 0.0, %v669
        %671 = vmatmul.f32.gmra.mxu0 %v447
        %v672 = vpop.f32.mrf.mxu0
        %v673 = vadd.f32 0.0, %v672
        %674 = vmatmul.f32.gmra.mxu0 %v450
        %v675 = vpop.f32.mrf.mxu0
        %v676 = vadd.f32 0.0, %v675
        %677 = vmatmul.f32.gmra.mxu0 %v453
        %v678 = vpop.f32.mrf.mxu0
        %v679 = vadd.f32 0.0, %v678
        %680 = vmatmul.f32.gmra.mxu0 %v456
        %v681 = vpop.f32.mrf.mxu0
        %v682 = vadd.f32 0.0, %v681
        %683 = vmatmul.f32.gmra.mxu0 %v459
        %v684 = vpop.f32.mrf.mxu0
        %v685 = vadd.f32 0.0, %v684
        %686 = vmatmul.f32.gmra.mxu0 %v462
        %v687 = vpop.f32.mrf.mxu0
        %v688 = vadd.f32 0.0, %v687
        %689 = vmatmul.f32.gmra.mxu0 %v465
        %v690 = vpop.f32.mrf.mxu0
        %v691 = vadd.f32 0.0, %v690
        %692 = vmatmul.f32.gmra.mxu0 %v468
        %v693 = vpop.f32.mrf.mxu0
        %v694 = vadd.f32 0.0, %v693
        %695 = vmatmul.f32.gmra.mxu0 %v471
        %v696 = vpop.f32.mrf.mxu0
        %v697 = vadd.f32 0.0, %v696
        %698 = vmatmul.f32.gmra.mxu0 %v474
        %v699 = vpop.f32.mrf.mxu0
        %v700 = vadd.f32 0.0, %v699
        %701 = vmatmul.f32.gmra.mxu0 %v477
        %v702 = vpop.f32.mrf.mxu0
        %v703 = vadd.f32 0.0, %v702
        %704 = vmatmul.f32.gmra.mxu0 %v480
        %v705 = vpop.f32.mrf.mxu0
        %v706 = vadd.f32 0.0, %v705
        %707 = vmatmul.f32.gmra.mxu0 %v483
        %v708 = vpop.f32.mrf.mxu0
        %v709 = vadd.f32 0.0, %v708
        %710 = vmatmul.f32.gmra.mxu0 %v486
        %v711 = vpop.f32.mrf.mxu0
        %v712 = vadd.f32 0.0, %v711
        %713 = vmatmul.f32.gmra.mxu0 %v489
        %v714 = vpop.f32.mrf.mxu0
        %v715 = vadd.f32 0.0, %v714
        %716 = vmatmul.f32.gmra.mxu0 %v492
        %v717 = vpop.f32.mrf.mxu0
        %v718 = vadd.f32 0.0, %v717
        %719 = vmatmul.f32.gmra.mxu0 %v495
        %v720 = vpop.f32.mrf.mxu0
        %v721 = vadd.f32 0.0, %v720
        %722 = vmatmul.f32.gmra.mxu0 %v498
        %v723 = vpop.f32.mrf.mxu0
        %v724 = vadd.f32 0.0, %v723
        %725 = vmatmul.f32.gmra.mxu0 %v501
        %v726 = vpop.f32.mrf.mxu0
        %v727 = vadd.f32 0.0, %v726
        %728 = vmatmul.f32.gmra.mxu0 %v504
        %v729 = vpop.f32.mrf.mxu0
        %v730 = vadd.f32 0.0, %v729
        %731 = vmatmul.f32.gmra.mxu0 %v507
        %v732 = vpop.f32.mrf.mxu0
        %v733 = vadd.f32 0.0, %v732
        %734 = vmatmul.f32.gmra.mxu0 %v510
        %v735 = vpop.f32.mrf.mxu0
        %v736 = vadd.f32 0.0, %v735
        %737 = vmatmul.f32.gmra.mxu0 %v513
        %v738 = vpop.f32.mrf.mxu0
        %v739 = vadd.f32 0.0, %v738
        %740 = vmatmul.f32.gmra.mxu0 %v516
        %v741 = vpop.f32.mrf.mxu0
        %v742 = vadd.f32 0.0, %v741
        %743 = vmatmul.f32.gmra.mxu0 %v519
        %v744 = vpop.f32.mrf.mxu0
        %v745 = vadd.f32 0.0, %v744
        %746 = vmatmul.f32.gmra.mxu0 %v522
        %v747 = vpop.f32.mrf.mxu0
        %v748 = vadd.f32 0.0, %v747
        %749 = vmatmul.f32.gmra.mxu0 %v525
        %v750 = vpop.f32.mrf.mxu0
        %v751 = vadd.f32 0.0, %v750
        %752 = vmatmul.f32.gmra.mxu0 %v528
        %v753 = vpop.f32.mrf.mxu0
        %v754 = vadd.f32 0.0, %v753
        %755 = vdwg.mxu0
        %v756 = vld [vmem:[%s3] sm:$0xff]
        %v757 = vld [vmem:[%s3 + $0x8] sm:$0xff]
        %v758 = vld [vmem:[%s3 + $0x10] sm:$0xff]
        %v759 = vld [vmem:[%s3 + $0x18] sm:$0xff]
        %v760 = vld [vmem:[%s4] sm:$0xff]
        %v761 = vld [vmem:[%s4 + $0x8] sm:$0xff]
        %v762 = vld [vmem:[%s4 + $0x10] sm:$0xff]
        %v763 = vld [vmem:[%s4 + $0x18] sm:$0xff]
        %765 = vset.pattern.permute.xlu0 0
        %766 = vperm.xlu0 %765, %v760
        %v767 = vpop.permute.xlu0 %766
        %770 = vset.pattern.permute.xlu0 0
        %771 = vperm.xlu0 %770, %v761
        %v772 = vpop.permute.xlu0 %771
        %775 = vset.pattern.permute.xlu0 0
        %776 = vperm.xlu0 %775, %v762
        %v777 = vpop.permute.xlu0 %776
        %780 = vset.pattern.permute.xlu0 0
        %781 = vperm.xlu0 %780, %v763
        %v782 = vpop.permute.xlu0 %781
        %vm784 = vcmask 261120
        %v786 = vsel %vm784, %v756, 0
        %v789 = vsel %vm784, %v757, 0
        %v792 = vsel %vm784, %v758, 0
        %v795 = vsel %vm784, %v759, 0
        %797 = vmatpush.msra.mxu0 0.0
        %798 = vmatpush.msra.mxu0 0.0
        %799 = vmatpush.msra.mxu0 0.0
        %800 = vmatpush.msra.mxu0 0.0
        %801 = vmatpush.msra.mxu0 0.0
        %802 = vmatpush.msra.mxu0 0.0
        %803 = vmatpush.msra.mxu0 0.0
        %804 = vmatpush.msra.mxu0 0.0
        %805 = vmatpush.msra.mxu0 0.0
        %806 = vmatpush.msra.mxu0 0.0
        %807 = vmatpush.msra.mxu0 0.0
        %808 = vmatpush.msra.mxu0 0.0
        %809 = vmatpush.msra.mxu0 %v383
        %810 = vmatpush.msra.mxu0 %v381
        %811 = vmatpush.msra.mxu0 %v379
        %812 = vmatpush.msra.mxu0 %v377
        %813 = vmatmul.f32.gmra.mxu0 %v786
        %v814 = vpop.f32.mrf.mxu0
        %v815 = vadd.f32 %v767, %v814
        %816 = vmatmul.f32.gmra.mxu0 %v789
        %v817 = vpop.f32.mrf.mxu0
        %v818 = vadd.f32 %v772, %v817
        %819 = vmatmul.f32.gmra.mxu0 %v792
        %v820 = vpop.f32.mrf.mxu0
        %v821 = vadd.f32 %v777, %v820
        %822 = vmatmul.f32.gmra.mxu0 %v795
        %v823 = vpop.f32.mrf.mxu0
        %v824 = vadd.f32 %v782, %v823
        %825 = vdwg.mxu0
        %826 = vmatpush.msra.mxu0 0.0
        %827 = vmatpush.msra.mxu0 0.0
        %828 = vmatpush.msra.mxu0 0.0
        %829 = vmatpush.msra.mxu0 0.0
        %830 = vmatpush.msra.mxu0 0.0
        %831 = vmatpush.msra.mxu0 0.0
        %832 = vmatpush.msra.mxu0 0.0
        %833 = vmatpush.msra.mxu0 0.0
        %834 = vmatpush.msra.mxu0 0.0
        %835 = vmatpush.msra.mxu0 0.0
        %836 = vmatpush.msra.mxu0 0.0
        %837 = vmatpush.msra.mxu0 0.0
        %838 = vmatpush.msra.mxu0 %v384
        %839 = vmatpush.msra.mxu0 %v382
        %840 = vmatpush.msra.mxu0 %v380
        %841 = vmatpush.msra.mxu0 %v378
        %842 = vmatmul.f32.gmra.mxu0 %v786
        %v843 = vpop.f32.mrf.mxu0
        %v844 = vadd.f32 %v767, %v843
        %845 = vmatmul.f32.gmra.mxu0 %v789
        %v846 = vpop.f32.mrf.mxu0
        %v847 = vadd.f32 %v772, %v846
        %848 = vmatmul.f32.gmra.mxu0 %v792
        %v849 = vpop.f32.mrf.mxu0
        %v850 = vadd.f32 %v777, %v849
        %851 = vmatmul.f32.gmra.mxu0 %v795
        %v852 = vpop.f32.mrf.mxu0
        %v853 = vadd.f32 %v782, %v852
        %854 = vdwg.mxu0
        %v855 = vsub.f32 %v815, %v596
        %v856 = vsub.f32 %v844, %v709
        %v857 = vsub.f32 %v818, %v599
        %v858 = vsub.f32 %v847, %v712
        %v859 = vsub.f32 %v821, %v602
        %v860 = vsub.f32 %v850, %v715
        %v861 = vsub.f32 %v824, %v605
        %v862 = vsub.f32 %v853, %v718
        %v863 = vxor.u32 %v855, 2147483648
        %v864 = vxor.u32 %v856, 2147483648
        %v865 = vxor.u32 %v857, 2147483648
        %v866 = vxor.u32 %v858, 2147483648
        %v867 = vxor.u32 %v859, 2147483648
        %v868 = vxor.u32 %v860, 2147483648
        %v869 = vxor.u32 %v861, 2147483648
        %v870 = vxor.u32 %v862, 2147483648
        %v871 = vmul.f32 %v863, 1.442695
        %v872 = vpow.pop %v871
        %v873 = vmul.f32 %v864, 1.442695
        %v874 = vpow.pop %v873
        %v875 = vmul.f32 %v865, 1.442695
        %v876 = vpow.pop %v875
        %v877 = vmul.f32 %v866, 1.442695
        %v878 = vpow.pop %v877
        %v879 = vmul.f32 %v867, 1.442695
        %v880 = vpow.pop %v879
        %v881 = vmul.f32 %v868, 1.442695
        %v882 = vpow.pop %v881
        %v883 = vmul.f32 %v869, 1.442695
        %v884 = vpow.pop %v883
        %v885 = vmul.f32 %v870, 1.442695
        %v886 = vpow.pop %v885
        %v887 = vadd.f32 %v872, 1.0
        %v888 = vadd.f32 %v874, 1.0
        %v889 = vadd.f32 %v876, 1.0
        %v890 = vadd.f32 %v878, 1.0
        %v891 = vadd.f32 %v880, 1.0
        %v892 = vadd.f32 %v882, 1.0
        %v893 = vadd.f32 %v884, 1.0
        %v894 = vadd.f32 %v886, 1.0
        %v895 = vrcp.pop %v887
        %v896 = vmul.f32 %v887, %v895
        %v897 = vsub.f32 1.0, %v896
        %v898 = vmul.f32 %v895, %v897
        %v899 = vadd.f32 %v895, %v898
        %vm900 = vweird.f32 %v887
        %vm901 = vweird.f32 %v895
        %vm902 = vmor %vm900, %vm901
        %v903 = vsel %vm902, %v895, %v899
        %v904 = vand.u32 2147483647, %v887
        %vm905 = vcmp.eq.f32.partialorder %v904, 8.507059e+37
        %v906 = vand.u32 %v887, 2147483648
        %v907 = vor.u32 1.1754944e-38, %v906
        %v908 = vsel %vm905, %v907, %v903
        %v909 = vmul.f32 1.0, %v908
        %v910 = vrcp.pop %v888
        %v911 = vmul.f32 %v888, %v910
        %v912 = vsub.f32 1.0, %v911
        %v913 = vmul.f32 %v910, %v912
        %v914 = vadd.f32 %v910, %v913
        %vm915 = vweird.f32 %v888
        %vm916 = vweird.f32 %v910
        %vm917 = vmor %vm915, %vm916
        %v918 = vsel %vm917, %v910, %v914
        %v919 = vand.u32 2147483647, %v888
        %vm920 = vcmp.eq.f32.partialorder %v919, 8.507059e+37
        %v921 = vand.u32 %v888, 2147483648
        %v922 = vor.u32 1.1754944e-38, %v921
        %v923 = vsel %vm920, %v922, %v918
        %v924 = vmul.f32 1.0, %v923
        %v925 = vrcp.pop %v889
        %v926 = vmul.f32 %v889, %v925
        %v927 = vsub.f32 1.0, %v926
        %v928 = vmul.f32 %v925, %v927
        %v929 = vadd.f32 %v925, %v928
        %vm930 = vweird.f32 %v889
        %vm931 = vweird.f32 %v925
        %vm932 = vmor %vm930, %vm931
        %v933 = vsel %vm932, %v925, %v929
        %v934 = vand.u32 2147483647, %v889
        %vm935 = vcmp.eq.f32.partialorder %v934, 8.507059e+37
        %v936 = vand.u32 %v889, 2147483648
        %v937 = vor.u32 1.1754944e-38, %v936
        %v938 = vsel %vm935, %v937, %v933
        %v939 = vmul.f32 1.0, %v938
        %v940 = vrcp.pop %v890
        %v941 = vmul.f32 %v890, %v940
        %v942 = vsub.f32 1.0, %v941
        %v943 = vmul.f32 %v940, %v942
        %v944 = vadd.f32 %v940, %v943
        %vm945 = vweird.f32 %v890
        %vm946 = vweird.f32 %v940
        %vm947 = vmor %vm945, %vm946
        %v948 = vsel %vm947, %v940, %v944
        %v949 = vand.u32 2147483647, %v890
        %vm950 = vcmp.eq.f32.partialorder %v949, 8.507059e+37
        %v951 = vand.u32 %v890, 2147483648
        %v952 = vor.u32 1.1754944e-38, %v951
        %v953 = vsel %vm950, %v952, %v948
        %v954 = vmul.f32 1.0, %v953
        %v955 = vrcp.pop %v891
        %v956 = vmul.f32 %v891, %v955
        %v957 = vsub.f32 1.0, %v956
        %v958 = vmul.f32 %v955, %v957
        %v959 = vadd.f32 %v955, %v958
        %vm960 = vweird.f32 %v891
        %vm961 = vweird.f32 %v955
        %vm962 = vmor %vm960, %vm961
        %v963 = vsel %vm962, %v955, %v959
        %v964 = vand.u32 2147483647, %v891
        %vm965 = vcmp.eq.f32.partialorder %v964, 8.507059e+37
        %v966 = vand.u32 %v891, 2147483648
        %v967 = vor.u32 1.1754944e-38, %v966
        %v968 = vsel %vm965, %v967, %v963
        %v969 = vmul.f32 1.0, %v968
        %v970 = vrcp.pop %v892
        %v971 = vmul.f32 %v892, %v970
        %v972 = vsub.f32 1.0, %v971
        %v973 = vmul.f32 %v970, %v972
        %v974 = vadd.f32 %v970, %v973
        %vm975 = vweird.f32 %v892
        %vm976 = vweird.f32 %v970
        %vm977 = vmor %vm975, %vm976
        %v978 = vsel %vm977, %v970, %v974
        %v979 = vand.u32 2147483647, %v892
        %vm980 = vcmp.eq.f32.partialorder %v979, 8.507059e+37
        %v981 = vand.u32 %v892, 2147483648
        %v982 = vor.u32 1.1754944e-38, %v981
        %v983 = vsel %vm980, %v982, %v978
        %v984 = vmul.f32 1.0, %v983
        %v985 = vrcp.pop %v893
        %v986 = vmul.f32 %v893, %v985
        %v987 = vsub.f32 1.0, %v986
        %v988 = vmul.f32 %v985, %v987
        %v989 = vadd.f32 %v985, %v988
        %vm990 = vweird.f32 %v893
        %vm991 = vweird.f32 %v985
        %vm992 = vmor %vm990, %vm991
        %v993 = vsel %vm992, %v985, %v989
        %v994 = vand.u32 2147483647, %v893
        %vm995 = vcmp.eq.f32.partialorder %v994, 8.507059e+37
        %v996 = vand.u32 %v893, 2147483648
        %v997 = vor.u32 1.1754944e-38, %v996
        %v998 = vsel %vm995, %v997, %v993
        %v999 = vmul.f32 1.0, %v998
        %v1000 = vrcp.pop %v894
        %v1001 = vmul.f32 %v894, %v1000
        %v1002 = vsub.f32 1.0, %v1001
        %v1003 = vmul.f32 %v1000, %v1002
        %v1004 = vadd.f32 %v1000, %v1003
        %vm1005 = vweird.f32 %v894
        %vm1006 = vweird.f32 %v1000
        %vm1007 = vmor %vm1005, %vm1006
        %v1008 = vsel %vm1007, %v1000, %v1004
        %v1009 = vand.u32 2147483647, %v894
        %vm1010 = vcmp.eq.f32.partialorder %v1009, 8.507059e+37
        %v1011 = vand.u32 %v894, 2147483648
        %v1012 = vor.u32 1.1754944e-38, %v1011
        %v1013 = vsel %vm1010, %v1012, %v1008
        %v1014 = vmul.f32 1.0, %v1013
        %v1015 = vmul.f32 %v548, %v909
        %v1016 = vmul.f32 %v661, %v924
        %v1017 = vmul.f32 %v551, %v939
        %v1018 = vmul.f32 %v664, %v954
        %v1019 = vmul.f32 %v554, %v969
        %v1020 = vmul.f32 %v667, %v984
        %v1021 = vmul.f32 %v557, %v999
        %v1022 = vmul.f32 %v670, %v1014
        %v1023 = vadd.f32 %v1015, 0.0
        %v1024 = vadd.f32 %v1016, 0.0
        %v1025 = vadd.f32 %v1017, 0.0
        %v1026 = vadd.f32 %v1018, 0.0
        %v1027 = vadd.f32 %v1019, 0.0
        %v1028 = vadd.f32 %v1020, 0.0
        %v1029 = vadd.f32 %v1021, 0.0
        %v1030 = vadd.f32 %v1022, 0.0
        %v1031 = vadd.f32 %v909, 0.0
        %v1032 = vadd.f32 %v924, 0.0
        %v1033 = vadd.f32 %v939, 0.0
        %v1034 = vadd.f32 %v954, 0.0
        %v1035 = vadd.f32 %v969, 0.0
        %v1036 = vadd.f32 %v984, 0.0
        %v1037 = vadd.f32 %v999, 0.0
        %v1038 = vadd.f32 %v1014, 0.0
        %v1039 = vsub.f32 %v815, %v608
        %v1040 = vsub.f32 %v844, %v721
        %v1041 = vsub.f32 %v818, %v611
        %v1042 = vsub.f32 %v847, %v724
        %v1043 = vsub.f32 %v821, %v614
        %v1044 = vsub.f32 %v850, %v727
        %v1045 = vsub.f32 %v824, %v617
        %v1046 = vsub.f32 %v853, %v730
        %v1047 = vxor.u32 %v1039, 2147483648
        %v1048 = vxor.u32 %v1040, 2147483648
        %v1049 = vxor.u32 %v1041, 2147483648
        %v1050 = vxor.u32 %v1042, 2147483648
        %v1051 = vxor.u32 %v1043, 2147483648
        %v1052 = vxor.u32 %v1044, 2147483648
        %v1053 = vxor.u32 %v1045, 2147483648
        %v1054 = vxor.u32 %v1046, 2147483648
        %v1055 = vmul.f32 %v1047, 1.442695
        %v1056 = vpow.pop %v1055
        %v1057 = vmul.f32 %v1048, 1.442695
        %v1058 = vpow.pop %v1057
        %v1059 = vmul.f32 %v1049, 1.442695
        %v1060 = vpow.pop %v1059
        %v1061 = vmul.f32 %v1050, 1.442695
        %v1062 = vpow.pop %v1061
        %v1063 = vmul.f32 %v1051, 1.442695
        %v1064 = vpow.pop %v1063
        %v1065 = vmul.f32 %v1052, 1.442695
        %v1066 = vpow.pop %v1065
        %v1067 = vmul.f32 %v1053, 1.442695
        %v1068 = vpow.pop %v1067
        %v1069 = vmul.f32 %v1054, 1.442695
        %v1070 = vpow.pop %v1069
        %v1071 = vadd.f32 %v1056, 1.0
        %v1072 = vadd.f32 %v1058, 1.0
        %v1073 = vadd.f32 %v1060, 1.0
        %v1074 = vadd.f32 %v1062, 1.0
        %v1075 = vadd.f32 %v1064, 1.0
        %v1076 = vadd.f32 %v1066, 1.0
        %v1077 = vadd.f32 %v1068, 1.0
        %v1078 = vadd.f32 %v1070, 1.0
        %v1079 = vrcp.pop %v1071
        %v1080 = vmul.f32 %v1071, %v1079
        %v1081 = vsub.f32 1.0, %v1080
        %v1082 = vmul.f32 %v1079, %v1081
        %v1083 = vadd.f32 %v1079, %v1082
        %vm1084 = vweird.f32 %v1071
        %vm1085 = vweird.f32 %v1079
        %vm1086 = vmor %vm1084, %vm1085
        %v1087 = vsel %vm1086, %v1079, %v1083
        %v1088 = vand.u32 2147483647, %v1071
        %vm1089 = vcmp.eq.f32.partialorder %v1088, 8.507059e+37
        %v1090 = vand.u32 %v1071, 2147483648
        %v1091 = vor.u32 1.1754944e-38, %v1090
        %v1092 = vsel %vm1089, %v1091, %v1087
        %v1093 = vmul.f32 1.0, %v1092
        %v1094 = vrcp.pop %v1072
        %v1095 = vmul.f32 %v1072, %v1094
        %v1096 = vsub.f32 1.0, %v1095
        %v1097 = vmul.f32 %v1094, %v1096
        %v1098 = vadd.f32 %v1094, %v1097
        %vm1099 = vweird.f32 %v1072
        %vm1100 = vweird.f32 %v1094
        %vm1101 = vmor %vm1099, %vm1100
        %v1102 = vsel %vm1101, %v1094, %v1098
        %v1103 = vand.u32 2147483647, %v1072
        %vm1104 = vcmp.eq.f32.partialorder %v1103, 8.507059e+37
        %v1105 = vand.u32 %v1072, 2147483648
        %v1106 = vor.u32 1.1754944e-38, %v1105
        %v1107 = vsel %vm1104, %v1106, %v1102
        %v1108 = vmul.f32 1.0, %v1107
        %v1109 = vrcp.pop %v1073
        %v1110 = vmul.f32 %v1073, %v1109
        %v1111 = vsub.f32 1.0, %v1110
        %v1112 = vmul.f32 %v1109, %v1111
        %v1113 = vadd.f32 %v1109, %v1112
        %vm1114 = vweird.f32 %v1073
        %vm1115 = vweird.f32 %v1109
        %vm1116 = vmor %vm1114, %vm1115
        %v1117 = vsel %vm1116, %v1109, %v1113
        %v1118 = vand.u32 2147483647, %v1073
        %vm1119 = vcmp.eq.f32.partialorder %v1118, 8.507059e+37
        %v1120 = vand.u32 %v1073, 2147483648
        %v1121 = vor.u32 1.1754944e-38, %v1120
        %v1122 = vsel %vm1119, %v1121, %v1117
        %v1123 = vmul.f32 1.0, %v1122
        %v1124 = vrcp.pop %v1074
        %v1125 = vmul.f32 %v1074, %v1124
        %v1126 = vsub.f32 1.0, %v1125
        %v1127 = vmul.f32 %v1124, %v1126
        %v1128 = vadd.f32 %v1124, %v1127
        %vm1129 = vweird.f32 %v1074
        %vm1130 = vweird.f32 %v1124
        %vm1131 = vmor %vm1129, %vm1130
        %v1132 = vsel %vm1131, %v1124, %v1128
        %v1133 = vand.u32 2147483647, %v1074
        %vm1134 = vcmp.eq.f32.partialorder %v1133, 8.507059e+37
        %v1135 = vand.u32 %v1074, 2147483648
        %v1136 = vor.u32 1.1754944e-38, %v1135
        %v1137 = vsel %vm1134, %v1136, %v1132
        %v1138 = vmul.f32 1.0, %v1137
        %v1139 = vrcp.pop %v1075
        %v1140 = vmul.f32 %v1075, %v1139
        %v1141 = vsub.f32 1.0, %v1140
        %v1142 = vmul.f32 %v1139, %v1141
        %v1143 = vadd.f32 %v1139, %v1142
        %vm1144 = vweird.f32 %v1075
        %vm1145 = vweird.f32 %v1139
        %vm1146 = vmor %vm1144, %vm1145
        %v1147 = vsel %vm1146, %v1139, %v1143
        %v1148 = vand.u32 2147483647, %v1075
        %vm1149 = vcmp.eq.f32.partialorder %v1148, 8.507059e+37
        %v1150 = vand.u32 %v1075, 2147483648
        %v1151 = vor.u32 1.1754944e-38, %v1150
        %v1152 = vsel %vm1149, %v1151, %v1147
        %v1153 = vmul.f32 1.0, %v1152
        %v1154 = vrcp.pop %v1076
        %v1155 = vmul.f32 %v1076, %v1154
        %v1156 = vsub.f32 1.0, %v1155
        %v1157 = vmul.f32 %v1154, %v1156
        %v1158 = vadd.f32 %v1154, %v1157
        %vm1159 = vweird.f32 %v1076
        %vm1160 = vweird.f32 %v1154
        %vm1161 = vmor %vm1159, %vm1160
        %v1162 = vsel %vm1161, %v1154, %v1158
        %v1163 = vand.u32 2147483647, %v1076
        %vm1164 = vcmp.eq.f32.partialorder %v1163, 8.507059e+37
        %v1165 = vand.u32 %v1076, 2147483648
        %v1166 = vor.u32 1.1754944e-38, %v1165
        %v1167 = vsel %vm1164, %v1166, %v1162
        %v1168 = vmul.f32 1.0, %v1167
        %v1169 = vrcp.pop %v1077
        %v1170 = vmul.f32 %v1077, %v1169
        %v1171 = vsub.f32 1.0, %v1170
        %v1172 = vmul.f32 %v1169, %v1171
        %v1173 = vadd.f32 %v1169, %v1172
        %vm1174 = vweird.f32 %v1077
        %vm1175 = vweird.f32 %v1169
        %vm1176 = vmor %vm1174, %vm1175
        %v1177 = vsel %vm1176, %v1169, %v1173
        %v1178 = vand.u32 2147483647, %v1077
        %vm1179 = vcmp.eq.f32.partialorder %v1178, 8.507059e+37
        %v1180 = vand.u32 %v1077, 2147483648
        %v1181 = vor.u32 1.1754944e-38, %v1180
        %v1182 = vsel %vm1179, %v1181, %v1177
        %v1183 = vmul.f32 1.0, %v1182
        %v1184 = vrcp.pop %v1078
        %v1185 = vmul.f32 %v1078, %v1184
        %v1186 = vsub.f32 1.0, %v1185
        %v1187 = vmul.f32 %v1184, %v1186
        %v1188 = vadd.f32 %v1184, %v1187
        %vm1189 = vweird.f32 %v1078
        %vm1190 = vweird.f32 %v1184
        %vm1191 = vmor %vm1189, %vm1190
        %v1192 = vsel %vm1191, %v1184, %v1188
        %v1193 = vand.u32 2147483647, %v1078
        %vm1194 = vcmp.eq.f32.partialorder %v1193, 8.507059e+37
        %v1195 = vand.u32 %v1078, 2147483648
        %v1196 = vor.u32 1.1754944e-38, %v1195
        %v1197 = vsel %vm1194, %v1196, %v1192
        %v1198 = vmul.f32 1.0, %v1197
        %v1199 = vmul.f32 %v560, %v1093
        %v1200 = vmul.f32 %v673, %v1108
        %v1201 = vmul.f32 %v563, %v1123
        %v1202 = vmul.f32 %v676, %v1138
        %v1203 = vmul.f32 %v566, %v1153
        %v1204 = vmul.f32 %v679, %v1168
        %v1205 = vmul.f32 %v569, %v1183
        %v1206 = vmul.f32 %v682, %v1198
        %v1207 = vadd.f32 %v1023, %v1199
        %v1208 = vadd.f32 %v1024, %v1200
        %v1209 = vadd.f32 %v1025, %v1201
        %v1210 = vadd.f32 %v1026, %v1202
        %v1211 = vadd.f32 %v1027, %v1203
        %v1212 = vadd.f32 %v1028, %v1204
        %v1213 = vadd.f32 %v1029, %v1205
        %v1214 = vadd.f32 %v1030, %v1206
        %v1215 = vadd.f32 %v1031, %v1093
        %v1216 = vadd.f32 %v1032, %v1108
        %v1217 = vadd.f32 %v1033, %v1123
        %v1218 = vadd.f32 %v1034, %v1138
        %v1219 = vadd.f32 %v1035, %v1153
        %v1220 = vadd.f32 %v1036, %v1168
        %v1221 = vadd.f32 %v1037, %v1183
        %v1222 = vadd.f32 %v1038, %v1198
        %v1223 = vsub.f32 %v815, %v620
        %v1224 = vsub.f32 %v844, %v733
        %v1225 = vsub.f32 %v818, %v623
        %v1226 = vsub.f32 %v847, %v736
        %v1227 = vsub.f32 %v821, %v626
        %v1228 = vsub.f32 %v850, %v739
        %v1229 = vsub.f32 %v824, %v629
        %v1230 = vsub.f32 %v853, %v742
        %v1231 = vxor.u32 %v1223, 2147483648
        %v1232 = vxor.u32 %v1224, 2147483648
        %v1233 = vxor.u32 %v1225, 2147483648
        %v1234 = vxor.u32 %v1226, 2147483648
        %v1235 = vxor.u32 %v1227, 2147483648
        %v1236 = vxor.u32 %v1228, 2147483648
        %v1237 = vxor.u32 %v1229, 2147483648
        %v1238 = vxor.u32 %v1230, 2147483648
        %v1239 = vmul.f32 %v1231, 1.442695
        %v1240 = vpow.pop %v1239
        %v1241 = vmul.f32 %v1232, 1.442695
        %v1242 = vpow.pop %v1241
        %v1243 = vmul.f32 %v1233, 1.442695
        %v1244 = vpow.pop %v1243
        %v1245 = vmul.f32 %v1234, 1.442695
        %v1246 = vpow.pop %v1245
        %v1247 = vmul.f32 %v1235, 1.442695
        %v1248 = vpow.pop %v1247
        %v1249 = vmul.f32 %v1236, 1.442695
        %v1250 = vpow.pop %v1249
        %v1251 = vmul.f32 %v1237, 1.442695
        %v1252 = vpow.pop %v1251
        %v1253 = vmul.f32 %v1238, 1.442695
        %v1254 = vpow.pop %v1253
        %v1255 = vadd.f32 %v1240, 1.0
        %v1256 = vadd.f32 %v1242, 1.0
        %v1257 = vadd.f32 %v1244, 1.0
        %v1258 = vadd.f32 %v1246, 1.0
        %v1259 = vadd.f32 %v1248, 1.0
        %v1260 = vadd.f32 %v1250, 1.0
        %v1261 = vadd.f32 %v1252, 1.0
        %v1262 = vadd.f32 %v1254, 1.0
        %v1263 = vrcp.pop %v1255
        %v1264 = vmul.f32 %v1255, %v1263
        %v1265 = vsub.f32 1.0, %v1264
        %v1266 = vmul.f32 %v1263, %v1265
        %v1267 = vadd.f32 %v1263, %v1266
        %vm1268 = vweird.f32 %v1255
        %vm1269 = vweird.f32 %v1263
        %vm1270 = vmor %vm1268, %vm1269
        %v1271 = vsel %vm1270, %v1263, %v1267
        %v1272 = vand.u32 2147483647, %v1255
        %vm1273 = vcmp.eq.f32.partialorder %v1272, 8.507059e+37
        %v1274 = vand.u32 %v1255, 2147483648
        %v1275 = vor.u32 1.1754944e-38, %v1274
        %v1276 = vsel %vm1273, %v1275, %v1271
        %v1277 = vmul.f32 1.0, %v1276
        %v1278 = vrcp.pop %v1256
        %v1279 = vmul.f32 %v1256, %v1278
        %v1280 = vsub.f32 1.0, %v1279
        %v1281 = vmul.f32 %v1278, %v1280
        %v1282 = vadd.f32 %v1278, %v1281
        %vm1283 = vweird.f32 %v1256
        %vm1284 = vweird.f32 %v1278
        %vm1285 = vmor %vm1283, %vm1284
        %v1286 = vsel %vm1285, %v1278, %v1282
        %v1287 = vand.u32 2147483647, %v1256
        %vm1288 = vcmp.eq.f32.partialorder %v1287, 8.507059e+37
        %v1289 = vand.u32 %v1256, 2147483648
        %v1290 = vor.u32 1.1754944e-38, %v1289
        %v1291 = vsel %vm1288, %v1290, %v1286
        %v1292 = vmul.f32 1.0, %v1291
        %v1293 = vrcp.pop %v1257
        %v1294 = vmul.f32 %v1257, %v1293
        %v1295 = vsub.f32 1.0, %v1294
        %v1296 = vmul.f32 %v1293, %v1295
        %v1297 = vadd.f32 %v1293, %v1296
        %vm1298 = vweird.f32 %v1257
        %vm1299 = vweird.f32 %v1293
        %vm1300 = vmor %vm1298, %vm1299
        %v1301 = vsel %vm1300, %v1293, %v1297
        %v1302 = vand.u32 2147483647, %v1257
        %vm1303 = vcmp.eq.f32.partialorder %v1302, 8.507059e+37
        %v1304 = vand.u32 %v1257, 2147483648
        %v1305 = vor.u32 1.1754944e-38, %v1304
        %v1306 = vsel %vm1303, %v1305, %v1301
        %v1307 = vmul.f32 1.0, %v1306
        %v1308 = vrcp.pop %v1258
        %v1309 = vmul.f32 %v1258, %v1308
        %v1310 = vsub.f32 1.0, %v1309
        %v1311 = vmul.f32 %v1308, %v1310
        %v1312 = vadd.f32 %v1308, %v1311
        %vm1313 = vweird.f32 %v1258
        %vm1314 = vweird.f32 %v1308
        %vm1315 = vmor %vm1313, %vm1314
        %v1316 = vsel %vm1315, %v1308, %v1312
        %v1317 = vand.u32 2147483647, %v1258
        %vm1318 = vcmp.eq.f32.partialorder %v1317, 8.507059e+37
        %v1319 = vand.u32 %v1258, 2147483648
        %v1320 = vor.u32 1.1754944e-38, %v1319
        %v1321 = vsel %vm1318, %v1320, %v1316
        %v1322 = vmul.f32 1.0, %v1321
        %v1323 = vrcp.pop %v1259
        %v1324 = vmul.f32 %v1259, %v1323
        %v1325 = vsub.f32 1.0, %v1324
        %v1326 = vmul.f32 %v1323, %v1325
        %v1327 = vadd.f32 %v1323, %v1326
        %vm1328 = vweird.f32 %v1259
        %vm1329 = vweird.f32 %v1323
        %vm1330 = vmor %vm1328, %vm1329
        %v1331 = vsel %vm1330, %v1323, %v1327
        %v1332 = vand.u32 2147483647, %v1259
        %vm1333 = vcmp.eq.f32.partialorder %v1332, 8.507059e+37
        %v1334 = vand.u32 %v1259, 2147483648
        %v1335 = vor.u32 1.1754944e-38, %v1334
        %v1336 = vsel %vm1333, %v1335, %v1331
        %v1337 = vmul.f32 1.0, %v1336
        %v1338 = vrcp.pop %v1260
        %v1339 = vmul.f32 %v1260, %v1338
        %v1340 = vsub.f32 1.0, %v1339
        %v1341 = vmul.f32 %v1338, %v1340
        %v1342 = vadd.f32 %v1338, %v1341
        %vm1343 = vweird.f32 %v1260
        %vm1344 = vweird.f32 %v1338
        %vm1345 = vmor %vm1343, %vm1344
        %v1346 = vsel %vm1345, %v1338, %v1342
        %v1347 = vand.u32 2147483647, %v1260
        %vm1348 = vcmp.eq.f32.partialorder %v1347, 8.507059e+37
        %v1349 = vand.u32 %v1260, 2147483648
        %v1350 = vor.u32 1.1754944e-38, %v1349
        %v1351 = vsel %vm1348, %v1350, %v1346
        %v1352 = vmul.f32 1.0, %v1351
        %v1353 = vrcp.pop %v1261
        %v1354 = vmul.f32 %v1261, %v1353
        %v1355 = vsub.f32 1.0, %v1354
        %v1356 = vmul.f32 %v1353, %v1355
        %v1357 = vadd.f32 %v1353, %v1356
        %vm1358 = vweird.f32 %v1261
        %vm1359 = vweird.f32 %v1353
        %vm1360 = vmor %vm1358, %vm1359
        %v1361 = vsel %vm1360, %v1353, %v1357
        %v1362 = vand.u32 2147483647, %v1261
        %vm1363 = vcmp.eq.f32.partialorder %v1362, 8.507059e+37
        %v1364 = vand.u32 %v1261, 2147483648
        %v1365 = vor.u32 1.1754944e-38, %v1364
        %v1366 = vsel %vm1363, %v1365, %v1361
        %v1367 = vmul.f32 1.0, %v1366
        %v1368 = vrcp.pop %v1262
        %v1369 = vmul.f32 %v1262, %v1368
        %v1370 = vsub.f32 1.0, %v1369
        %v1371 = vmul.f32 %v1368, %v1370
        %v1372 = vadd.f32 %v1368, %v1371
        %vm1373 = vweird.f32 %v1262
        %vm1374 = vweird.f32 %v1368
        %vm1375 = vmor %vm1373, %vm1374
        %v1376 = vsel %vm1375, %v1368, %v1372
        %v1377 = vand.u32 2147483647, %v1262
        %vm1378 = vcmp.eq.f32.partialorder %v1377, 8.507059e+37
        %v1379 = vand.u32 %v1262, 2147483648
        %v1380 = vor.u32 1.1754944e-38, %v1379
        %v1381 = vsel %vm1378, %v1380, %v1376
        %v1382 = vmul.f32 1.0, %v1381
        %v1383 = vmul.f32 %v572, %v1277
        %v1384 = vmul.f32 %v685, %v1292
        %v1385 = vmul.f32 %v575, %v1307
        %v1386 = vmul.f32 %v688, %v1322
        %v1387 = vmul.f32 %v578, %v1337
        %v1388 = vmul.f32 %v691, %v1352
        %v1389 = vmul.f32 %v581, %v1367
        %v1390 = vmul.f32 %v694, %v1382
        %v1391 = vadd.f32 %v1207, %v1383
        %v1392 = vadd.f32 %v1208, %v1384
        %v1393 = vadd.f32 %v1209, %v1385
        %v1394 = vadd.f32 %v1210, %v1386
        %v1395 = vadd.f32 %v1211, %v1387
        %v1396 = vadd.f32 %v1212, %v1388
        %v1397 = vadd.f32 %v1213, %v1389
        %v1398 = vadd.f32 %v1214, %v1390
        %v1399 = vadd.f32 %v1215, %v1277
        %v1400 = vadd.f32 %v1216, %v1292
        %v1401 = vadd.f32 %v1217, %v1307
        %v1402 = vadd.f32 %v1218, %v1322
        %v1403 = vadd.f32 %v1219, %v1337
        %v1404 = vadd.f32 %v1220, %v1352
        %v1405 = vadd.f32 %v1221, %v1367
        %v1406 = vadd.f32 %v1222, %v1382
        %v1407 = vsub.f32 %v815, %v632
        %v1408 = vsub.f32 %v844, %v745
        %v1409 = vsub.f32 %v818, %v635
        %v1410 = vsub.f32 %v847, %v748
        %v1411 = vsub.f32 %v821, %v638
        %v1412 = vsub.f32 %v850, %v751
        %v1413 = vsub.f32 %v824, %v641
        %v1414 = vsub.f32 %v853, %v754
        %v1415 = vxor.u32 %v1407, 2147483648
        %v1416 = vxor.u32 %v1408, 2147483648
        %v1417 = vxor.u32 %v1409, 2147483648
        %v1418 = vxor.u32 %v1410, 2147483648
        %v1419 = vxor.u32 %v1411, 2147483648
        %v1420 = vxor.u32 %v1412, 2147483648
        %v1421 = vxor.u32 %v1413, 2147483648
        %v1422 = vxor.u32 %v1414, 2147483648
        %v1423 = vmul.f32 %v1415, 1.442695
        %v1424 = vpow.pop %v1423
        %v1425 = vmul.f32 %v1416, 1.442695
        %v1426 = vpow.pop %v1425
        %v1427 = vmul.f32 %v1417, 1.442695
        %v1428 = vpow.pop %v1427
        %v1429 = vmul.f32 %v1418, 1.442695
        %v1430 = vpow.pop %v1429
        %v1431 = vmul.f32 %v1419, 1.442695
        %v1432 = vpow.pop %v1431
        %v1433 = vmul.f32 %v1420, 1.442695
        %v1434 = vpow.pop %v1433
        %v1435 = vmul.f32 %v1421, 1.442695
        %v1436 = vpow.pop %v1435
        %v1437 = vmul.f32 %v1422, 1.442695
        %v1438 = vpow.pop %v1437
        %v1439 = vadd.f32 %v1424, 1.0
        %v1440 = vadd.f32 %v1426, 1.0
        %v1441 = vadd.f32 %v1428, 1.0
        %v1442 = vadd.f32 %v1430, 1.0
        %v1443 = vadd.f32 %v1432, 1.0
        %v1444 = vadd.f32 %v1434, 1.0
        %v1445 = vadd.f32 %v1436, 1.0
        %v1446 = vadd.f32 %v1438, 1.0
        %v1447 = vrcp.pop %v1439
        %v1448 = vmul.f32 %v1439, %v1447
        %v1449 = vsub.f32 1.0, %v1448
        %v1450 = vmul.f32 %v1447, %v1449
        %v1451 = vadd.f32 %v1447, %v1450
        %vm1452 = vweird.f32 %v1439
        %vm1453 = vweird.f32 %v1447
        %vm1454 = vmor %vm1452, %vm1453
        %v1455 = vsel %vm1454, %v1447, %v1451
        %v1456 = vand.u32 2147483647, %v1439
        %vm1457 = vcmp.eq.f32.partialorder %v1456, 8.507059e+37
        %v1458 = vand.u32 %v1439, 2147483648
        %v1459 = vor.u32 1.1754944e-38, %v1458
        %v1460 = vsel %vm1457, %v1459, %v1455
        %v1461 = vmul.f32 1.0, %v1460
        %v1462 = vrcp.pop %v1440
        %v1463 = vmul.f32 %v1440, %v1462
        %v1464 = vsub.f32 1.0, %v1463
        %v1465 = vmul.f32 %v1462, %v1464
        %v1466 = vadd.f32 %v1462, %v1465
        %vm1467 = vweird.f32 %v1440
        %vm1468 = vweird.f32 %v1462
        %vm1469 = vmor %vm1467, %vm1468
        %v1470 = vsel %vm1469, %v1462, %v1466
        %v1471 = vand.u32 2147483647, %v1440
        %vm1472 = vcmp.eq.f32.partialorder %v1471, 8.507059e+37
        %v1473 = vand.u32 %v1440, 2147483648
        %v1474 = vor.u32 1.1754944e-38, %v1473
        %v1475 = vsel %vm1472, %v1474, %v1470
        %v1476 = vmul.f32 1.0, %v1475
        %v1477 = vrcp.pop %v1441
        %v1478 = vmul.f32 %v1441, %v1477
        %v1479 = vsub.f32 1.0, %v1478
        %v1480 = vmul.f32 %v1477, %v1479
        %v1481 = vadd.f32 %v1477, %v1480
        %vm1482 = vweird.f32 %v1441
        %vm1483 = vweird.f32 %v1477
        %vm1484 = vmor %vm1482, %vm1483
        %v1485 = vsel %vm1484, %v1477, %v1481
        %v1486 = vand.u32 2147483647, %v1441
        %vm1487 = vcmp.eq.f32.partialorder %v1486, 8.507059e+37
        %v1488 = vand.u32 %v1441, 2147483648
        %v1489 = vor.u32 1.1754944e-38, %v1488
        %v1490 = vsel %vm1487, %v1489, %v1485
        %v1491 = vmul.f32 1.0, %v1490
        %v1492 = vrcp.pop %v1442
        %v1493 = vmul.f32 %v1442, %v1492
        %v1494 = vsub.f32 1.0, %v1493
        %v1495 = vmul.f32 %v1492, %v1494
        %v1496 = vadd.f32 %v1492, %v1495
        %vm1497 = vweird.f32 %v1442
        %vm1498 = vweird.f32 %v1492
        %vm1499 = vmor %vm1497, %vm1498
        %v1500 = vsel %vm1499, %v1492, %v1496
        %v1501 = vand.u32 2147483647, %v1442
        %vm1502 = vcmp.eq.f32.partialorder %v1501, 8.507059e+37
        %v1503 = vand.u32 %v1442, 2147483648
        %v1504 = vor.u32 1.1754944e-38, %v1503
        %v1505 = vsel %vm1502, %v1504, %v1500
        %v1506 = vmul.f32 1.0, %v1505
        %v1507 = vrcp.pop %v1443
        %v1508 = vmul.f32 %v1443, %v1507
        %v1509 = vsub.f32 1.0, %v1508
        %v1510 = vmul.f32 %v1507, %v1509
        %v1511 = vadd.f32 %v1507, %v1510
        %vm1512 = vweird.f32 %v1443
        %vm1513 = vweird.f32 %v1507
        %vm1514 = vmor %vm1512, %vm1513
        %v1515 = vsel %vm1514, %v1507, %v1511
        %v1516 = vand.u32 2147483647, %v1443
        %vm1517 = vcmp.eq.f32.partialorder %v1516, 8.507059e+37
        %v1518 = vand.u32 %v1443, 2147483648
        %v1519 = vor.u32 1.1754944e-38, %v1518
        %v1520 = vsel %vm1517, %v1519, %v1515
        %v1521 = vmul.f32 1.0, %v1520
        %v1522 = vrcp.pop %v1444
        %v1523 = vmul.f32 %v1444, %v1522
        %v1524 = vsub.f32 1.0, %v1523
        %v1525 = vmul.f32 %v1522, %v1524
        %v1526 = vadd.f32 %v1522, %v1525
        %vm1527 = vweird.f32 %v1444
        %vm1528 = vweird.f32 %v1522
        %vm1529 = vmor %vm1527, %vm1528
        %v1530 = vsel %vm1529, %v1522, %v1526
        %v1531 = vand.u32 2147483647, %v1444
        %vm1532 = vcmp.eq.f32.partialorder %v1531, 8.507059e+37
        %v1533 = vand.u32 %v1444, 2147483648
        %v1534 = vor.u32 1.1754944e-38, %v1533
        %v1535 = vsel %vm1532, %v1534, %v1530
        %v1536 = vmul.f32 1.0, %v1535
        %v1537 = vrcp.pop %v1445
        %v1538 = vmul.f32 %v1445, %v1537
        %v1539 = vsub.f32 1.0, %v1538
        %v1540 = vmul.f32 %v1537, %v1539
        %v1541 = vadd.f32 %v1537, %v1540
        %vm1542 = vweird.f32 %v1445
        %vm1543 = vweird.f32 %v1537
        %vm1544 = vmor %vm1542, %vm1543
        %v1545 = vsel %vm1544, %v1537, %v1541
        %v1546 = vand.u32 2147483647, %v1445
        %vm1547 = vcmp.eq.f32.partialorder %v1546, 8.507059e+37
        %v1548 = vand.u32 %v1445, 2147483648
        %v1549 = vor.u32 1.1754944e-38, %v1548
        %v1550 = vsel %vm1547, %v1549, %v1545
        %v1551 = vmul.f32 1.0, %v1550
        %v1552 = vrcp.pop %v1446
        %v1553 = vmul.f32 %v1446, %v1552
        %v1554 = vsub.f32 1.0, %v1553
        %v1555 = vmul.f32 %v1552, %v1554
        %v1556 = vadd.f32 %v1552, %v1555
        %vm1557 = vweird.f32 %v1446
        %vm1558 = vweird.f32 %v1552
        %vm1559 = vmor %vm1557, %vm1558
        %v1560 = vsel %vm1559, %v1552, %v1556
        %v1561 = vand.u32 2147483647, %v1446
        %vm1562 = vcmp.eq.f32.partialorder %v1561, 8.507059e+37
        %v1563 = vand.u32 %v1446, 2147483648
        %v1564 = vor.u32 1.1754944e-38, %v1563
        %v1565 = vsel %vm1562, %v1564, %v1560
        %v1566 = vmul.f32 1.0, %v1565
        %v1567 = vmul.f32 %v584, %v1461
        %v1568 = vmul.f32 %v697, %v1476
        %v1569 = vmul.f32 %v587, %v1491
        %v1570 = vmul.f32 %v700, %v1506
        %v1571 = vmul.f32 %v590, %v1521
        %v1572 = vmul.f32 %v703, %v1536
        %v1573 = vmul.f32 %v593, %v1551
        %v1574 = vmul.f32 %v706, %v1566
        %v1575 = vadd.f32 %v1391, %v1567
        %v1576 = vadd.f32 %v1392, %v1568
        %v1577 = vadd.f32 %v1393, %v1569
        %v1578 = vadd.f32 %v1394, %v1570
        %v1579 = vadd.f32 %v1395, %v1571
        %v1580 = vadd.f32 %v1396, %v1572
        %v1581 = vadd.f32 %v1397, %v1573
        %v1582 = vadd.f32 %v1398, %v1574
        %v1583 = vadd.f32 %v1399, %v1461
        %v1584 = vadd.f32 %v1400, %v1476
        %v1585 = vadd.f32 %v1401, %v1491
        %v1586 = vadd.f32 %v1402, %v1506
        %v1587 = vadd.f32 %v1403, %v1521
        %v1588 = vadd.f32 %v1404, %v1536
        %v1589 = vadd.f32 %v1405, %v1551
        %v1590 = vadd.f32 %v1406, %v1566
        %v1591 = vrcp.pop %v1583
        %v1592 = vrcp.pop %v1584
        %v1593 = vrcp.pop %v1585
        %v1594 = vrcp.pop %v1586
        %v1595 = vrcp.pop %v1587
        %v1596 = vrcp.pop %v1588
        %v1597 = vrcp.pop %v1589
        %v1598 = vrcp.pop %v1590
        %v1599 = vmul.f32 %v1583, %v1591
        %v1600 = vmul.f32 %v1584, %v1592
        %v1601 = vmul.f32 %v1585, %v1593
        %v1602 = vmul.f32 %v1586, %v1594
        %v1603 = vmul.f32 %v1587, %v1595
        %v1604 = vmul.f32 %v1588, %v1596
        %v1605 = vmul.f32 %v1589, %v1597
        %v1606 = vmul.f32 %v1590, %v1598
        %v1607 = vsub.f32 2.0, %v1599
        %v1608 = vsub.f32 2.0, %v1600
        %v1609 = vsub.f32 2.0, %v1601
        %v1610 = vsub.f32 2.0, %v1602
        %v1611 = vsub.f32 2.0, %v1603
        %v1612 = vsub.f32 2.0, %v1604
        %v1613 = vsub.f32 2.0, %v1605
        %v1614 = vsub.f32 2.0, %v1606
        %v1615 = vmul.f32 %v1591, %v1607
        %v1616 = vmul.f32 %v1592, %v1608
        %v1617 = vmul.f32 %v1593, %v1609
        %v1618 = vmul.f32 %v1594, %v1610
        %v1619 = vmul.f32 %v1595, %v1611
        %v1620 = vmul.f32 %v1596, %v1612
        %v1621 = vmul.f32 %v1597, %v1613
        %v1622 = vmul.f32 %v1598, %v1614
        %v1623 = vmul.f32 %v1575, %v1615
        %v1624 = vmul.f32 %v1576, %v1616
        %v1625 = vmul.f32 %v1577, %v1617
        %v1626 = vmul.f32 %v1578, %v1618
        %v1627 = vmul.f32 %v1579, %v1619
        %v1628 = vmul.f32 %v1580, %v1620
        %v1629 = vmul.f32 %v1581, %v1621
        %v1630 = vmul.f32 %v1582, %v1622
        %v1631 = vld [vmem:[%s5] sm:$0xff]
        %v1632 = vld [vmem:[%s5 + $0x8] sm:$0xff]
        %v1633 = vld [vmem:[%s5 + $0x10] sm:$0xff]
        %v1634 = vld [vmem:[%s5 + $0x18] sm:$0xff]
        %v1635 = vld [vmem:[%s5 + $0x20] sm:$0xff]
        %v1636 = vld [vmem:[%s5 + $0x28] sm:$0xff]
        %v1637 = vld [vmem:[%s5 + $0x30] sm:$0xff]
        %v1638 = vld [vmem:[%s5 + $0x38] sm:$0xff]
        %v1639 = vld [vmem:[%s6] sm:$0xff]
        %v1640 = vld [vmem:[%s6 + $0x8] sm:$0xff]
        %v1641 = vld [vmem:[%s6 + $0x10] sm:$0xff]
        %v1642 = vld [vmem:[%s6 + $0x18] sm:$0xff]
        %v1643 = vld [vmem:[%s6 + $0x20] sm:$0xff]
        %v1644 = vld [vmem:[%s6 + $0x28] sm:$0xff]
        %v1645 = vld [vmem:[%s6 + $0x30] sm:$0xff]
        %v1646 = vld [vmem:[%s6 + $0x38] sm:$0xff]
        %v1648 = vsel %vm784, %v1639, 0
        %v1651 = vsel %vm784, %v1640, 0
        %v1654 = vsel %vm784, %v1641, 0
        %v1657 = vsel %vm784, %v1642, 0
        %v1660 = vsel %vm784, %v1643, 0
        %v1663 = vsel %vm784, %v1644, 0
        %v1666 = vsel %vm784, %v1645, 0
        %v1669 = vsel %vm784, %v1646, 0
        %1671 = vmatpush.msra.mxu0 0.0
        %1672 = vmatpush.msra.mxu0 0.0
        %1673 = vmatpush.msra.mxu0 0.0
        %1674 = vmatpush.msra.mxu0 0.0
        %1675 = vmatpush.msra.mxu0 0.0
        %1676 = vmatpush.msra.mxu0 0.0
        %1677 = vmatpush.msra.mxu0 0.0
        %1678 = vmatpush.msra.mxu0 0.0
        %1679 = vmatpush.msra.mxu0 0.0
        %1680 = vmatpush.msra.mxu0 0.0
        %1681 = vmatpush.msra.mxu0 0.0
        %1682 = vmatpush.msra.mxu0 0.0
        %1683 = vmatpush.msra.mxu0 %v383
        %1684 = vmatpush.msra.mxu0 %v381
        %1685 = vmatpush.msra.mxu0 %v379
        %1686 = vmatpush.msra.mxu0 %v377
        %1687 = vmatmul.f32.gmra.mxu0 %v1648
        %v1688 = vpop.f32.mrf.mxu0
        %v1689 = vadd.f32 0.0, %v1688
        %1690 = vmatmul.f32.gmra.mxu0 %v1651
        %v1691 = vpop.f32.mrf.mxu0
        %v1692 = vadd.f32 0.0, %v1691
        %1693 = vmatmul.f32.gmra.mxu0 %v1654
        %v1694 = vpop.f32.mrf.mxu0
        %v1695 = vadd.f32 0.0, %v1694
        %1696 = vmatmul.f32.gmra.mxu0 %v1657
        %v1697 = vpop.f32.mrf.mxu0
        %v1698 = vadd.f32 0.0, %v1697
        %1699 = vmatmul.f32.gmra.mxu0 %v1660
        %v1700 = vpop.f32.mrf.mxu0
        %v1701 = vadd.f32 0.0, %v1700
        %1702 = vmatmul.f32.gmra.mxu0 %v1663
        %v1703 = vpop.f32.mrf.mxu0
        %v1704 = vadd.f32 0.0, %v1703
        %1705 = vmatmul.f32.gmra.mxu0 %v1666
        %v1706 = vpop.f32.mrf.mxu0
        %v1707 = vadd.f32 0.0, %v1706
        %1708 = vmatmul.f32.gmra.mxu0 %v1669
        %v1709 = vpop.f32.mrf.mxu0
        %v1710 = vadd.f32 0.0, %v1709
        %1711 = vdwg.mxu0
        %1712 = vmatpush.msra.mxu0 0.0
        %1713 = vmatpush.msra.mxu0 0.0
        %1714 = vmatpush.msra.mxu0 0.0
        %1715 = vmatpush.msra.mxu0 0.0
        %1716 = vmatpush.msra.mxu0 0.0
        %1717 = vmatpush.msra.mxu0 0.0
        %1718 = vmatpush.msra.mxu0 0.0
        %1719 = vmatpush.msra.mxu0 0.0
        %1720 = vmatpush.msra.mxu0 0.0
        %1721 = vmatpush.msra.mxu0 0.0
        %1722 = vmatpush.msra.mxu0 0.0
        %1723 = vmatpush.msra.mxu0 0.0
        %1724 = vmatpush.msra.mxu0 %v384
        %1725 = vmatpush.msra.mxu0 %v382
        %1726 = vmatpush.msra.mxu0 %v380
        %1727 = vmatpush.msra.mxu0 %v378
        %1728 = vmatmul.f32.gmra.mxu0 %v1648
        %v1729 = vpop.f32.mrf.mxu0
        %v1730 = vadd.f32 0.0, %v1729
        %1731 = vmatmul.f32.gmra.mxu0 %v1651
        %v1732 = vpop.f32.mrf.mxu0
        %v1733 = vadd.f32 0.0, %v1732
        %1734 = vmatmul.f32.gmra.mxu0 %v1654
        %v1735 = vpop.f32.mrf.mxu0
        %v1736 = vadd.f32 0.0, %v1735
        %1737 = vmatmul.f32.gmra.mxu0 %v1657
        %v1738 = vpop.f32.mrf.mxu0
        %v1739 = vadd.f32 0.0, %v1738
        %1740 = vmatmul.f32.gmra.mxu0 %v1660
        %v1741 = vpop.f32.mrf.mxu0
        %v1742 = vadd.f32 0.0, %v1741
        %1743 = vmatmul.f32.gmra.mxu0 %v1663
        %v1744 = vpop.f32.mrf.mxu0
        %v1745 = vadd.f32 0.0, %v1744
        %1746 = vmatmul.f32.gmra.mxu0 %v1666
        %v1747 = vpop.f32.mrf.mxu0
        %v1748 = vadd.f32 0.0, %v1747
        %1749 = vmatmul.f32.gmra.mxu0 %v1669
        %v1750 = vpop.f32.mrf.mxu0
        %v1751 = vadd.f32 0.0, %v1750
        %1752 = vdwg.mxu0
        %v1754 = vsel %vm784, %v1631, 0
        %v1757 = vsel %vm784, %v1632, 0
        %v1760 = vsel %vm784, %v1633, 0
        %v1763 = vsel %vm784, %v1634, 0
        %v1766 = vsel %vm784, %v1635, 0
        %v1769 = vsel %vm784, %v1636, 0
        %v1772 = vsel %vm784, %v1637, 0
        %v1775 = vsel %vm784, %v1638, 0
        %1777 = vmatpush.msra.mxu0 0.0
        %1778 = vmatpush.msra.mxu0 0.0
        %1779 = vmatpush.msra.mxu0 0.0
        %1780 = vmatpush.msra.mxu0 0.0
        %1781 = vmatpush.msra.mxu0 0.0
        %1782 = vmatpush.msra.mxu0 0.0
        %1783 = vmatpush.msra.mxu0 0.0
        %1784 = vmatpush.msra.mxu0 0.0
        %1785 = vmatpush.msra.mxu0 0.0
        %1786 = vmatpush.msra.mxu0 0.0
        %1787 = vmatpush.msra.mxu0 0.0
        %1788 = vmatpush.msra.mxu0 0.0
        %1789 = vmatpush.msra.mxu0 %v1629
        %1790 = vmatpush.msra.mxu0 %v1627
        %1791 = vmatpush.msra.mxu0 %v1625
        %1792 = vmatpush.msra.mxu0 %v1623
        %1793 = vmatmul.f32.gmra.mxu0 %v1754
        %v1794 = vpop.f32.mrf.mxu0
        %v1795 = vadd.f32 %v1689, %v1794
        %1796 = vmatmul.f32.gmra.mxu0 %v1757
        %v1797 = vpop.f32.mrf.mxu0
        %v1798 = vadd.f32 %v1692, %v1797
        %1799 = vmatmul.f32.gmra.mxu0 %v1760
        %v1800 = vpop.f32.mrf.mxu0
        %v1801 = vadd.f32 %v1695, %v1800
        %1802 = vmatmul.f32.gmra.mxu0 %v1763
        %v1803 = vpop.f32.mrf.mxu0
        %v1804 = vadd.f32 %v1698, %v1803
        %1805 = vmatmul.f32.gmra.mxu0 %v1766
        %v1806 = vpop.f32.mrf.mxu0
        %v1807 = vadd.f32 %v1701, %v1806
        %1808 = vmatmul.f32.gmra.mxu0 %v1769
        %v1809 = vpop.f32.mrf.mxu0
        %v1810 = vadd.f32 %v1704, %v1809
        %1811 = vmatmul.f32.gmra.mxu0 %v1772
        %v1812 = vpop.f32.mrf.mxu0
        %v1813 = vadd.f32 %v1707, %v1812
        %1814 = vmatmul.f32.gmra.mxu0 %v1775
        %v1815 = vpop.f32.mrf.mxu0
        %v1816 = vadd.f32 %v1710, %v1815
        %1817 = vdwg.mxu0
        %1818 = vmatpush.msra.mxu0 0.0
        %1819 = vmatpush.msra.mxu0 0.0
        %1820 = vmatpush.msra.mxu0 0.0
        %1821 = vmatpush.msra.mxu0 0.0
        %1822 = vmatpush.msra.mxu0 0.0
        %1823 = vmatpush.msra.mxu0 0.0
        %1824 = vmatpush.msra.mxu0 0.0
        %1825 = vmatpush.msra.mxu0 0.0
        %1826 = vmatpush.msra.mxu0 0.0
        %1827 = vmatpush.msra.mxu0 0.0
        %1828 = vmatpush.msra.mxu0 0.0
        %1829 = vmatpush.msra.mxu0 0.0
        %1830 = vmatpush.msra.mxu0 %v1630
        %1831 = vmatpush.msra.mxu0 %v1628
        %1832 = vmatpush.msra.mxu0 %v1626
        %1833 = vmatpush.msra.mxu0 %v1624
        %1834 = vmatmul.f32.gmra.mxu0 %v1754
        %v1835 = vpop.f32.mrf.mxu0
        %v1836 = vadd.f32 %v1730, %v1835
        %1837 = vmatmul.f32.gmra.mxu0 %v1757
        %v1838 = vpop.f32.mrf.mxu0
        %v1839 = vadd.f32 %v1733, %v1838
        %1840 = vmatmul.f32.gmra.mxu0 %v1760
        %v1841 = vpop.f32.mrf.mxu0
        %v1842 = vadd.f32 %v1736, %v1841
        %1843 = vmatmul.f32.gmra.mxu0 %v1763
        %v1844 = vpop.f32.mrf.mxu0
        %v1845 = vadd.f32 %v1739, %v1844
        %1846 = vmatmul.f32.gmra.mxu0 %v1766
        %v1847 = vpop.f32.mrf.mxu0
        %v1848 = vadd.f32 %v1742, %v1847
        %1849 = vmatmul.f32.gmra.mxu0 %v1769
        %v1850 = vpop.f32.mrf.mxu0
        %v1851 = vadd.f32 %v1745, %v1850
        %1852 = vmatmul.f32.gmra.mxu0 %v1772
        %v1853 = vpop.f32.mrf.mxu0
        %v1854 = vadd.f32 %v1748, %v1853
        %1855 = vmatmul.f32.gmra.mxu0 %v1775
        %v1856 = vpop.f32.mrf.mxu0
        %v1857 = vadd.f32 %v1751, %v1856
        %1858 = vdwg.mxu0
        %v1859 = vld [vmem:[%s7] sm:$0xff]
        %v1860 = vld [vmem:[%s7 + $0x8] sm:$0xff]
        %v1861 = vld [vmem:[%s7 + $0x10] sm:$0xff]
        %v1862 = vld [vmem:[%s7 + $0x18] sm:$0xff]
        %v1863 = vld [vmem:[%s7 + $0x20] sm:$0xff]
        %v1864 = vld [vmem:[%s7 + $0x28] sm:$0xff]
        %v1865 = vld [vmem:[%s7 + $0x30] sm:$0xff]
        %v1866 = vld [vmem:[%s7 + $0x38] sm:$0xff]
        %1868 = vset.pattern.permute.xlu0 0
        %1869 = vperm.xlu0 %1868, %v1859
        %v1870 = vpop.permute.xlu0 %1869
        %1873 = vset.pattern.permute.xlu0 0
        %1874 = vperm.xlu0 %1873, %v1860
        %v1875 = vpop.permute.xlu0 %1874
        %1878 = vset.pattern.permute.xlu0 0
        %1879 = vperm.xlu0 %1878, %v1861
        %v1880 = vpop.permute.xlu0 %1879
        %1883 = vset.pattern.permute.xlu0 0
        %1884 = vperm.xlu0 %1883, %v1862
        %v1885 = vpop.permute.xlu0 %1884
        %1888 = vset.pattern.permute.xlu0 0
        %1889 = vperm.xlu0 %1888, %v1863
        %v1890 = vpop.permute.xlu0 %1889
        %1893 = vset.pattern.permute.xlu0 0
        %1894 = vperm.xlu0 %1893, %v1864
        %v1895 = vpop.permute.xlu0 %1894
        %1898 = vset.pattern.permute.xlu0 0
        %1899 = vperm.xlu0 %1898, %v1865
        %v1900 = vpop.permute.xlu0 %1899
        %1903 = vset.pattern.permute.xlu0 0
        %1904 = vperm.xlu0 %1903, %v1866
        %v1905 = vpop.permute.xlu0 %1904
        %v1907 = vadd.f32 %v1795, %v1870
        %v1908 = vadd.f32 %v1836, %v1870
        %v1909 = vadd.f32 %v1798, %v1875
        %v1910 = vadd.f32 %v1839, %v1875
        %v1911 = vadd.f32 %v1801, %v1880
        %v1912 = vadd.f32 %v1842, %v1880
        %v1913 = vadd.f32 %v1804, %v1885
        %v1914 = vadd.f32 %v1845, %v1885
        %v1915 = vadd.f32 %v1807, %v1890
        %v1916 = vadd.f32 %v1848, %v1890
        %v1917 = vadd.f32 %v1810, %v1895
        %v1918 = vadd.f32 %v1851, %v1895
        %v1919 = vadd.f32 %v1813, %v1900
        %v1920 = vadd.f32 %v1854, %v1900
        %v1921 = vadd.f32 %v1816, %v1905
        %v1922 = vadd.f32 %v1857, %v1905
        %v1923 = vmax.f32 %v1907, 0.0
        %v1924 = vmax.f32 %v1908, 0.0
        %v1925 = vmax.f32 %v1909, 0.0
        %v1926 = vmax.f32 %v1910, 0.0
        %v1927 = vmax.f32 %v1911, 0.0
        %v1928 = vmax.f32 %v1912, 0.0
        %v1929 = vmax.f32 %v1913, 0.0
        %v1930 = vmax.f32 %v1914, 0.0
        %v1931 = vmax.f32 %v1915, 0.0
        %v1932 = vmax.f32 %v1916, 0.0
        %v1933 = vmax.f32 %v1917, 0.0
        %v1934 = vmax.f32 %v1918, 0.0
        %v1935 = vmax.f32 %v1919, 0.0
        %v1936 = vmax.f32 %v1920, 0.0
        %v1937 = vmax.f32 %v1921, 0.0
        %v1938 = vmax.f32 %v1922, 0.0
        %1939 = vst [vmem:[%s354] sm:$0xff] %v1923
        %1940 = vst [vmem:[%s354 + $0x8] sm:$0xff] %v1924
        %1941 = vst [vmem:[%s354 + $0x10] sm:$0xff] %v1925
        %1942 = vst [vmem:[%s354 + $0x18] sm:$0xff] %v1926
        %1943 = vst [vmem:[%s354 + $0x20] sm:$0xff] %v1927
        %1944 = vst [vmem:[%s354 + $0x28] sm:$0xff] %v1928
        %1945 = vst [vmem:[%s354 + $0x30] sm:$0xff] %v1929
        %1946 = vst [vmem:[%s354 + $0x38] sm:$0xff] %v1930
        %1947 = vst [vmem:[%s354 + $0x40] sm:$0xff] %v1931
        %1948 = vst [vmem:[%s354 + $0x48] sm:$0xff] %v1932
        %1949 = vst [vmem:[%s354 + $0x50] sm:$0xff] %v1933
        %1950 = vst [vmem:[%s354 + $0x58] sm:$0xff] %v1934
        %1951 = vst [vmem:[%s354 + $0x60] sm:$0xff] %v1935
        %1952 = vst [vmem:[%s354 + $0x68] sm:$0xff] %v1936
        %1953 = vst [vmem:[%s354 + $0x70] sm:$0xff] %v1937
        %1954 = vst [vmem:[%s354 + $0x78] sm:$0xff] %v1938
        %s1955 = sand.u32 %s229, 1
        %s1956 = scalar_lea.sflag [#allocation3], %s1955
        %s1957 = sand.u32 %s229, 1
        %s1958 = smul.addr %s1957, 128
        %s1959 = scalar_lea.vmem [#allocation2], %s1958
        // Predicated region
        $region53: #{tpu_custom_call.1} parent=51 // pred_check
          %p1960 = pneg %p239
        $region54: #{tpu_custom_call.1} parent=51 // pred_check_branch
          %1962 = sbr.rel (%p1960) target = $region56
        $region55: #{tpu_custom_call.1} parent=51 // pred_region
          %s1963 = smul.u32 2, %s26
          %1965 = vsyncadd %s1956, 0
          %s1966 = smul.addr %s27, 16
          %s1967 = sadd.s32 %s1963, %s1966
          %s1968 = smul.addr %s1967, 8
          %s1969 = scalar_lea.hbm %s8, %s1968
          %s1970 = sshll.u32 %s1959, 4
          %s1971 = int_to_ptr.vmem [resolvable:$true] %s1970
          %s1972 = sshll.u32 %s1969, 4
          %s1973 = int_to_ptr.hbm [resolvable:$true] %s1972
          %1978 = dma.vmem_to_hbm [thread:$0]  %s1971, 2048, %s1973, %s1956, 256, 256, 16
        $region56: #{tpu_custom_call.1} parent=51 // pred_fallthru
          _
      $region52: #{tpu_custom_call.1} parent=5 // pred_fallthru
        _
      %p1979 = scmp.le.s32.totalorder 2, %s17
      // Predicated region
      $region57: #{tpu_custom_call.1} parent=5 // pred_check
        %p1980 = pneg %p1979
      $region58: #{tpu_custom_call.1} parent=5 // pred_check_branch
        %1982 = sbr.rel (%p1980) target = $region60
      $region59: #{tpu_custom_call.1} parent=5 // pred_region
        %s1983 = ssub.s32 %s17, 2
        // Predicated region
        $region61: #{tpu_custom_call.1} parent=59 // pred_check
          %p1984 = pneg %p245
        $region62: #{tpu_custom_call.1} parent=59 // pred_check_branch
          %1986 = sbr.rel (%p1984) target = $region64
        $region63: #{tpu_custom_call.1} parent=59 // pred_region
          %s1987 = sand.u32 %s230, 1
          %s1988 = scalar_lea.sflag [#allocation3], %s1987
          %s1989 = sand.u32 %s230, 1
          %s1990 = smul.addr %s1989, 128
          %s1991 = scalar_lea.vmem [#allocation2], %s1990
          %1993 = dma.done %s1988, 2048
        $region64: #{tpu_custom_call.1} parent=59 // pred_fallthru
          _
      $region60: #{tpu_custom_call.1} parent=5 // pred_fallthru
        _
    $region6: #{tpu_custom_call.1} parent=1 // loop_footer
      %s21 = sadd.s32 1, %s17
    $region7: #{tpu_custom_call.1} parent=1 // loop_footer_branch
      %16 = sbr.rel target = $region3
    $region8: #{tpu_custom_call.1} parent=1 // loop_exit
      _
    %1994 = vsyncpa [#allocation3], 1
    %s1995 = scalar_lea.sflag [#allocation3], 1
    %1996 = vsyncpa %s1995, 1

</llo_original>
